<compile_context>
chip_gen: v7x
topology: tpu7x:2x2x1
jax: 0.10.0
libtpu: 0.0.40
codegen_flags: <defaults>
</compile_context>

<pallas_src>
import jax
import jax.numpy as jnp
from jax.experimental import pallas as pl
from jax.experimental.pallas import tpu as pltpu


EMBED = 768
HIDDEN = 768


def attention_kernel(x_ref, w1_ref, bw_ref, out_ref):
    """Per-grid-step kernel.

    x_ref  : (TILE_B, S, E) bf16  streamed input tile
    w1_ref : (E, H)         bf16  ws1 weight, pre-transposed, VMEM-resident
    bw_ref : (2, H)         f32   row 0 = ws1 bias, row 1 = ws2 weight row, VMEM-resident
    out_ref: (TILE_B, E)    f32   sentence encodings for this tile
    """
    TB, S, E = x_ref.shape

    x = x_ref[...]                                   # (TB, S, E) bf16
    x2 = x.reshape(TB * S, E)                        # merge leading dims (lane dim unchanged)

    bw = bw_ref[...]                                 # (2, H) f32
    b1 = bw[0:1, :]                                  # ws1 bias row
    w2 = bw[1:2, :]                                  # ws2 weight row

    # ws1: bf16 operands on the MXU, f32 accumulation; bias add + tanh in f32
    # (f32 VPU/EUP is native on every generation, incl. v5e).
    h = jnp.dot(x2, w1_ref[...], preferred_element_type=jnp.float32) + b1
    h = jnp.tanh(h)                                  # (TB*S, H) f32 (EUP)

    # ws2 (out_features = 1): VPU multiply + lane reduction instead of an N=1
    # MXU matmul (keeps the MXU free).  ws2's bias is dropped: softmax is
    # shift-invariant, so adding the same scalar to every score is a no-op.
    scores = jnp.sum(h * w2, axis=-1, keepdims=True)     # (TB*S, 1) f32
    scores = scores.reshape(TB, S, 1)                    # split leading dim only

    # Numerically stable softmax over the sequence axis (dim=1), kept 3-D so
    # the reductions stay on the sublane axis (no relayout to lane width S).
    m = jnp.max(scores, axis=1, keepdims=True)           # (TB, 1, 1)
    p = jnp.exp(scores - m)                              # (TB, S, 1)
    denom = jnp.sum(p, axis=1, keepdims=True)            # (TB, 1, 1)
    attn = p / denom                                     # exact reciprocal (negligible cost)

    # Weighted sum over the sequence -> sentence encoding.  With small S the
    # broadcast multiply + axis-1 reduce rides otherwise-idle VPU/XLU slots;
    # keep it off the MXU.  Upcast x once for an f32 accumulate + lane-dense
    # f32 store.
    out_ref[...] = jnp.sum(x.astype(jnp.float32) * attn, axis=1)   # (TB, E) f32


def _plan_tiling(B, S, E, H):
    """Pick sequences-per-grid-step and the VMEM limit, generation-aware."""
    # --- generation-aware VMEM budget -------------------------------------
    try:
        phys_vmem = int(pltpu.get_tpu_info().vmem_capacity_bytes)
    except Exception:
        phys_vmem = 64 * 1024 * 1024          # conservative: assume v7x-sized VMEM
    if phys_vmem >= 100 * 1024 * 1024:        # v5e / v6e: 128 MiB physical
        vmem_limit = 64 * 1024 * 1024
        budget = 48 * 1024 * 1024
    else:                                     # v7x: 64 MiB physical (32 MiB scoped default)
        vmem_limit = 32 * 1024 * 1024
        budget = 24 * 1024 * 1024

    # --- per-token VMEM accounting (bytes) ---------------------------------
    #   x streamed bf16, double-buffered : 2 * E * 2
    #   h = tanh(x @ w1) intermediate f32: H * 4
    #   f32 upcast of the x*attn product : E * 4
    #   slack for exp / tanh temporaries : H * 4
    per_token = (2 * E * 2) + (H * 4) + (E * 4) + (H * 4)
    # fixed: w1 bf16 double-buffered + biases + double-buffered output + margin
    fixed = 2 * E * H * 2 + 2 * 1024 * 1024

    cap_tokens = max(S, (budget - fixed) // per_token)
    target_tokens = 2048                      # amortize ~0.35 us/step overhead to <10%

    tile_b = min(B, max(1, target_tokens // S), max(1, cap_tokens // S))

    # Give the grid a few steps when the batch is large enough so v7x's two
    # TensorCores both get batch tiles (the extra ~0.35 us/step is noise on
    # single-TC chips).
    if B > 8:
        want_tiles = 4 if B >= 64 else 2
        tile_b = min(tile_b, -(-B // want_tiles))

    if tile_b >= B:
        tile_b = B                            # single tile: block spans the full batch dim
    else:
        # Output block (tile_b, E): sublane dim must be a multiple of 8 unless
        # it spans the whole (padded) batch.
        tile_b = max(8, (tile_b // 8) * 8)
        # TODO(synk): if S is so long that even 8 sequences blow the VMEM budget,
        # a sequence-axis tiling would be needed; not reachable at HAN-scale S.
    return tile_b, vmem_limit


def attention_forward(vector, w1, b1, w2, b2):
    """vector: (B, S, E) f32.  w1: (H, E), b1: (H,), w2: (1, H), b2: (1,) (PyTorch layout)."""
    B, S, E = vector.shape
    H = w1.shape[0]

    # Pre-transpose ws1 so the kernel computes x @ W (+ b); ship it bf16
    # (halves the resident-weight DMA, native bf16 MXU path).  Fold b1 and the
    # ws2 row into a single (2, H) resident array.
    w1t = jnp.transpose(w1).astype(jnp.bfloat16)                       # (E, H)
    bw = jnp.concatenate([b1.reshape(1, H), w2.reshape(1, H)], axis=0) # (2, H)
    bw = bw.astype(jnp.float32)
    del b2  # softmax shift-invariance: ws2's bias cannot affect the output

    tile_b, vmem_limit = _plan_tiling(B, S, E, H)
    n_tiles = -(-B // tile_b)
    b_pad = n_tiles * tile_b

    # Stream x in bf16: halves the per-step HBM bytes (v6e was DMA-bound in f32).
    x = vector.astype(jnp.bfloat16)
    if b_pad != B:
        # Zero-padded sequences yield uniform attention over zeros -> zero rows,
        # sliced off below.  No NaNs.
        x = jnp.pad(x, ((0, b_pad - B), (0, 0), (0, 0)))

    out = pl.pallas_call(
        attention_kernel,
        out_shape=jax.ShapeDtypeStruct((b_pad, E), jnp.float32),
        grid_spec=pltpu.PrefetchScalarGridSpec(
            num_scalar_prefetch=0,
            grid=(n_tiles,),
            in_specs=[
                pl.BlockSpec((tile_b, S, E), lambda i: (i, 0, 0)),  # x: streamed bf16 tiles
                pl.BlockSpec((E, H), lambda i: (0, 0)),             # w1: resident bf16
                pl.BlockSpec((2, H), lambda i: (0, 0)),             # [b1; w2]: resident f32
            ],
            out_specs=pl.BlockSpec((tile_b, E), lambda i: (i, 0)),
        ),
        compiler_params=pltpu.CompilerParams(
            dimension_semantics=("parallel",),        # batch tiles are independent (v7x 2-TC split)
            vmem_limit_bytes=vmem_limit,              # generation-aware scoped VMEM
        ),
    )(x, w1t, bw)
    return out[:B]


def attention_reference(vector, w1, b1, w2, b2):
    """Pure-JAX (f32) reference mirroring the PyTorch attention() exactly."""
    a = jnp.tanh(jnp.einsum("bse,he->bsh", vector, w1) + b1)       # ws1 + tanh
    s = jnp.einsum("bsh,oh->bso", a, w2)[..., 0] + b2[0]           # ws2, squeeze(2)
    p = jax.nn.softmax(s, axis=1)                                  # softmax over dim=1
    return jnp.sum(vector * p[:, :, None], axis=1)


if __name__ == "__main__":
    # Small but module-consistent shapes: batch=2, seq=8, embed=hidden=768.
    B, S = 2, 8
    key = jax.random.PRNGKey(0)
    kx, kw1, kb1, kw2, kb2 = jax.random.split(key, 5)

    vector = jax.random.normal(kx, (B, S, EMBED), dtype=jnp.float32)

    # Deterministic parameter init (PyTorch Linear layout: weight (out, in), bias (out,)).
    w1 = jax.random.normal(kw1, (HIDDEN, EMBED), dtype=jnp.float32) * 0.02
    b1 = jax.random.normal(kb1, (HIDDEN,), dtype=jnp.float32) * 0.02
    w2 = jax.random.normal(kw2, (1, HIDDEN), dtype=jnp.float32) * 0.02
    b2 = jax.random.normal(kb2, (1,), dtype=jnp.float32) * 0.02

    out = attention_forward(vector, w1, b1, w2, b2)
    out = jax.block_until_ready(out)

    ref = attention_reference(vector, w1, b1, w2, b2)
    assert out.shape == (B, EMBED), out.shape
    # bf16 streamed input + bf16 MXU operands (f32 accumulation) -> looser tolerance
    # than pure f32.
    assert jnp.allclose(out, ref, atol=2e-2, rtol=2e-2), float(jnp.max(jnp.abs(out - ref)))

    print("KERNEL_OK")
</pallas_src>

<mosaic_0001>
module attributes {stable_mosaic.version = 11 : i64} {
  func.func @attention_kernel(%arg0: i32, %arg1: memref<2x8x768xbf16, #tpu.memory_space<vmem>>, %arg2: memref<768x768xbf16, #tpu.memory_space<vmem>>, %arg3: memref<2x768xf32, #tpu.memory_space<vmem>>, %arg4: memref<2x768xf32, #tpu.memory_space<vmem>>) attributes {dimension_semantics = [#tpu.dimension_semantics<parallel>], iteration_bounds = array<i64: 1>, scalar_prefetch = 0 : i64, scratch_operands = 0 : i64, tpu.core_type = #tpu.core_type<tc>, window_params = [{transform_indices = @transform_0, window_bounds = array<i64: 2, 8, 768>}, {pipeline_mode = #tpu.pipeline_mode<synchronous>, transform_indices = @transform_1, window_bounds = array<i64: 768, 768>}, {pipeline_mode = #tpu.pipeline_mode<synchronous>, transform_indices = @transform_2, window_bounds = array<i64: 2, 768>}, {transform_indices = @transform_3, window_bounds = array<i64: 2, 768>}]} {
    %c0 = arith.constant 0 : index
    %c0_0 = arith.constant 0 : index
    %c0_1 = arith.constant 0 : index
    %0 = vector.load %arg1[%c0, %c0_0, %c0_1] : memref<2x8x768xbf16, #tpu.memory_space<vmem>>, vector<2x8x768xbf16>
    %1 = vector.shape_cast %0 : vector<2x8x768xbf16> to vector<16x768xbf16>
    %c0_2 = arith.constant 0 : index
    %c0_3 = arith.constant 0 : index
    %2 = vector.load %arg3[%c0_2, %c0_3] : memref<2x768xf32, #tpu.memory_space<vmem>>, vector<2x768xf32>
    %3 = vector.extract_strided_slice %2 {offsets = [0, 0], sizes = [1, 768], strides = [1, 1]} : vector<2x768xf32> to vector<1x768xf32>
    %4 = vector.extract_strided_slice %2 {offsets = [1, 0], sizes = [1, 768], strides = [1, 1]} : vector<2x768xf32> to vector<1x768xf32>
    %c0_4 = arith.constant 0 : index
    %c0_5 = arith.constant 0 : index
    %5 = vector.load %arg2[%c0_4, %c0_5] : memref<768x768xbf16, #tpu.memory_space<vmem>>, vector<768x768xbf16>
    %cst = arith.constant dense<0.000000e+00> : vector<16x768xf32>
    %6 = tpu.matmul %1, %5, %cst {dimension_numbers = #tpu.dot_dimension_numbers<[1], [0], [0], [1], [0, 0, 1, 1], [], []>} : vector<16x768xbf16>, vector<768x768xbf16>, vector<16x768xf32> -> vector<16x768xf32>
    %7 = vector.broadcast %3 : vector<1x768xf32> to vector<16x768xf32>
    %8 = arith.addf %6, %7 : vector<16x768xf32>
    %9 = math.tanh %8 : vector<16x768xf32>
    %10 = vector.broadcast %4 : vector<1x768xf32> to vector<16x768xf32>
    %11 = arith.mulf %9, %10 : vector<16x768xf32>
    %cst_6 = arith.constant dense<0.000000e+00> : vector<16xf32>
    %12 = vector.multi_reduction <add>, %11, %cst_6 [1] : vector<16x768xf32> to vector<16xf32>
    %13 = vector.shape_cast %12 : vector<16xf32> to vector<16x1xf32>
    %14 = vector.shape_cast %13 : vector<16x1xf32> to vector<2x8x1xf32>
    %cst_7 = arith.constant dense<0xFF800000> : vector<2x1xf32>
    %15 = vector.multi_reduction <maximumf>, %14, %cst_7 [1] : vector<2x8x1xf32> to vector<2x1xf32>
    %16 = vector.shape_cast %15 : vector<2x1xf32> to vector<2x1x1xf32>
    %17 = vector.broadcast %16 : vector<2x1x1xf32> to vector<2x8x1xf32>
    %18 = arith.subf %14, %17 : vector<2x8x1xf32>
    %19 = math.exp %18 : vector<2x8x1xf32>
    %cst_8 = arith.constant dense<0.000000e+00> : vector<2x1xf32>
    %20 = vector.multi_reduction <add>, %19, %cst_8 [1] : vector<2x8x1xf32> to vector<2x1xf32>
    %21 = vector.shape_cast %20 : vector<2x1xf32> to vector<2x1x1xf32>
    %22 = vector.broadcast %21 : vector<2x1x1xf32> to vector<2x8x1xf32>
    %23 = arith.divf %19, %22 : vector<2x8x1xf32>
    %24 = arith.extf %0 : vector<2x8x768xbf16> to vector<2x8x768xf32>
    %25 = vector.broadcast %23 : vector<2x8x1xf32> to vector<2x8x768xf32>
    %26 = arith.mulf %24, %25 : vector<2x8x768xf32>
    %cst_9 = arith.constant dense<0.000000e+00> : vector<2x768xf32>
    %27 = vector.multi_reduction <add>, %26, %cst_9 [1] : vector<2x8x768xf32> to vector<2x768xf32>
    %c0_10 = arith.constant 0 : index
    %c0_11 = arith.constant 0 : index
    %28 = vector.load %arg4[%c0_10, %c0_11] : memref<2x768xf32, #tpu.memory_space<vmem>>, vector<2x768xf32>
    tpu.vector_store %arg4[%c0_10, %c0_11], %27 {strides = array<i32>} : memref<2x768xf32, #tpu.memory_space<vmem>>, vector<2x768xf32>,
    return
  }
  func.func @transform_0(%arg0: i32) -> (i32, i32, i32) {
    %c0_i32 = arith.constant 0 : i32
    %c0_i32_0 = arith.constant 0 : i32
    %c0_i32_1 = arith.constant 0 : i32
    return %arg0, %c0_i32, %c0_i32_0 : i32, i32, i32
  }
  func.func @transform_1(%arg0: i32) -> (i32, i32) {
    %c0_i32 = arith.constant 0 : i32
    %c0_i32_0 = arith.constant 0 : i32
    %c0_i32_1 = arith.constant 0 : i32
    return %c0_i32, %c0_i32_0 : i32, i32
  }
  func.func @transform_2(%arg0: i32) -> (i32, i32) {
    %c0_i32 = arith.constant 0 : i32
    %c0_i32_0 = arith.constant 0 : i32
    %c0_i32_1 = arith.constant 0 : i32
    return %c0_i32, %c0_i32_0 : i32, i32
  }
  func.func @transform_3(%arg0: i32) -> (i32, i32) {
    %c0_i32 = arith.constant 0 : i32
    %c0_i32_0 = arith.constant 0 : i32
    return %arg0, %c0_i32 : i32, i32
  }
}

</mosaic_0001>

<llo_original>
// kernel: tpu_custom_call.1
$region0: #{tpu_custom_call.1}
  #allocation0 [shape = 'u32[]', space=smem, size = 0x4, offset = 0x4, fixed_abs, tag = 'smem constant byte address 0x4 - core index']
  #allocation1 [shape = 'u32[144,128]{1,0:T(1,128)}', space=vmem, size = 0x12000, scoped, tag = 'internal scratch']
  %s0 = inlined_call_operand.hbm [shape: bf16[2,8,768], index: 0, kind: input, shape index: {}]
  %s1 = inlined_call_operand.hbm [shape: bf16[768,768], index: 1, kind: input, shape index: {}]
  %s2 = inlined_call_operand.hbm [shape: f32[2,768], index: 2, kind: input, shape index: {}]
  %s3 = inlined_call_operand.hbm [shape: f32[2,768], index: 3, kind: output, shape index: {}]
  %s4 = sld [smem:[#allocation0]]
  $region34: #{tpu_custom_call.1} parent=0
    _
  %s6 = ssub.s32 1, %s4
  %s7 = scalar_select 0, %s6, %s4
  $region1: #{tpu_custom_call.1} parent=0
    #allocation2 [shape = 'u8[24576]{0}', space=vmem, size = 0x6000, scoped, tag = 'input window, operand 0, single buffered']
    #allocation3 [shape = 's32[1]{0}', space=sflag, size = 0x4, scoped, tag = 'scoped memory for tpu_custom_call.1']
    #allocation4 [shape = 's32[1]{0}', space=sflag, size = 0x4, scoped, tag = 'scoped memory for tpu_custom_call.1']
    #allocation5 [shape = 'u8[1179648]{0}', space=vmem, size = 0x120000, scoped, tag = 'input window, operand 1, single buffered']
    #allocation6 [shape = 's32[1]{0}', space=sflag, size = 0x4, scoped, tag = 'scoped memory for tpu_custom_call.1']
    #allocation7 [shape = 'u8[6144]{0}', space=vmem, size = 0x1800, scoped, tag = 'input window, operand 2, single buffered']
    #allocation8 [shape = 'u8[6144]{0}', space=vmem, size = 0x1800, scoped, tag = 'output window, operand 0, single buffered']
    %8 = vsyncpa [#allocation3], 0
    %9 = vsyncpa [#allocation6], 0
    %10 = vsyncpa [#allocation4], 0
    // Predicated region
    $region2: #{tpu_custom_call.1} parent=1 // pred_check
      _
    $region3: #{tpu_custom_call.1} parent=1 // pred_check_branch
      %12 = sbr.rel (0) target = $region5
    $region4: #{tpu_custom_call.1} parent=1 // pred_region
      %s14 = ssub.s32 768, 768
      %15 = vsyncadd [#allocation3], %s14
      %s16 = sshll.u32 [#allocation2], 4
      %s17 = int_to_ptr.vmem [resolvable:$true] %s16
      %22 = dma.hbm_to_vmem [thread:$0]  %s0, 768, %s17, [#allocation3], 384, 384, 24
    $region5: #{tpu_custom_call.1} parent=1 // pred_fallthru
      _
    // Predicated region
    $region6: #{tpu_custom_call.1} parent=1 // pred_check
      _
    $region7: #{tpu_custom_call.1} parent=1 // pred_check_branch
      %24 = sbr.rel (0) target = $region9
    $region8: #{tpu_custom_call.1} parent=1 // pred_region
      %s26 = ssub.s32 36864, 36864
      %27 = vsyncadd [#allocation6], %s26
      %s28 = sshll.u32 [#allocation5], 4
      %s29 = int_to_ptr.vmem [resolvable:$true] %s28
      %34 = dma.hbm_to_vmem [thread:$0]  %s1, 36864, %s29, [#allocation6], 384, 384, 24
    $region9: #{tpu_custom_call.1} parent=1 // pred_fallthru
      _
    // Predicated region
    $region10: #{tpu_custom_call.1} parent=1 // pred_check
      _
    $region11: #{tpu_custom_call.1} parent=1 // pred_check_branch
      %36 = sbr.rel (0) target = $region13
    $region12: #{tpu_custom_call.1} parent=1 // pred_region
      %s38 = ssub.s32 192, 192
      %39 = vsyncadd [#allocation6], %s38
      %s41 = sshll.u32 [#allocation7], 4
      %s42 = int_to_ptr.vmem [resolvable:$true] %s41
      %44 = dma.hbm_to_vmem [thread:$0]  %s2, 192, %s42, [#allocation6]
    $region13: #{tpu_custom_call.1} parent=1 // pred_fallthru
      _
    // Predicated region
    $region14: #{tpu_custom_call.1} parent=1 // pred_check
      _
    $region15: #{tpu_custom_call.1} parent=1 // pred_check_branch
      %46 = sbr.rel (0) target = $region17
    $region16: #{tpu_custom_call.1} parent=1 // pred_region
      %47 = dma.done [#allocation3], 768
    $region17: #{tpu_custom_call.1} parent=1 // pred_fallthru
      _
    // Predicated region
    $region18: #{tpu_custom_call.1} parent=1 // pred_check
      _
    $region19: #{tpu_custom_call.1} parent=1 // pred_check_branch
      %49 = sbr.rel (0) target = $region21
    $region20: #{tpu_custom_call.1} parent=1 // pred_region
      %50 = dma.done [#allocation6], 36864
    $region21: #{tpu_custom_call.1} parent=1 // pred_fallthru
      _
    // Predicated region
    $region22: #{tpu_custom_call.1} parent=1 // pred_check
      _
    $region23: #{tpu_custom_call.1} parent=1 // pred_check_branch
      %52 = sbr.rel (0) target = $region25
    $region24: #{tpu_custom_call.1} parent=1 // pred_region
      %53 = dma.done [#allocation6], 192
    $region25: #{tpu_custom_call.1} parent=1 // pred_fallthru
      _
    %v54 = vld [vmem:[#allocation2] sm:$0xff]
    %v55 = vld [vmem:[#allocation2 + $0x8] sm:$0xff]
    %v56 = vld [vmem:[#allocation2 + $0x10] sm:$0xff]
    %v57 = vld [vmem:[#allocation2 + $0x18] sm:$0xff]
    %v58 = vld [vmem:[#allocation2 + $0x20] sm:$0xff]
    %v59 = vld [vmem:[#allocation2 + $0x28] sm:$0xff]
    %v60 = vld [vmem:[#allocation7] sm:$0xff]
    %v61 = vld [vmem:[#allocation7 + $0x8] sm:$0xf]
    %v62 = vld [vmem:[#allocation5] sm:$0xff]
    %v63 = vld [vmem:[#allocation5 + $0x8] sm:$0xff]
    %v64 = vld [vmem:[#allocation5 + $0x10] sm:$0xff]
    %v65 = vld [vmem:[#allocation5 + $0x18] sm:$0xff]
    %v66 = vld [vmem:[#allocation5 + $0x20] sm:$0xff]
    %v67 = vld [vmem:[#allocation5 + $0x28] sm:$0xff]
    %v68 = vld [vmem:[#allocation5 + $0x30] sm:$0xff]
    %v69 = vld [vmem:[#allocation5 + $0x38] sm:$0xff]
    %v70 = vld [vmem:[#allocation5 + $0x40] sm:$0xff]
    %v71 = vld [vmem:[#allocation5 + $0x48] sm:$0xff]
    %v72 = vld [vmem:[#allocation5 + $0x50] sm:$0xff]
    %v73 = vld [vmem:[#allocation5 + $0x58] sm:$0xff]
    %v74 = vld [vmem:[#allocation5 + $0x60] sm:$0xff]
    %v75 = vld [vmem:[#allocation5 + $0x68] sm:$0xff]
    %v76 = vld [vmem:[#allocation5 + $0x70] sm:$0xff]
    %v77 = vld [vmem:[#allocation5 + $0x78] sm:$0xff]
    %v78 = vld [vmem:[#allocation5 + $0x80] sm:$0xff]
    %v79 = vld [vmem:[#allocation5 + $0x88] sm:$0xff]
    %v80 = vld [vmem:[#allocation5 + $0x90] sm:$0xff]
    %v81 = vld [vmem:[#allocation5 + $0x98] sm:$0xff]
    %v82 = vld [vmem:[#allocation5 + $0xa0] sm:$0xff]
    %v83 = vld [vmem:[#allocation5 + $0xa8] sm:$0xff]
    %v84 = vld [vmem:[#allocation5 + $0xb0] sm:$0xff]
    %v85 = vld [vmem:[#allocation5 + $0xb8] sm:$0xff]
    %v86 = vld [vmem:[#allocation5 + $0xc0] sm:$0xff]
    %v87 = vld [vmem:[#allocation5 + $0xc8] sm:$0xff]
    %v88 = vld [vmem:[#allocation5 + $0xd0] sm:$0xff]
    %v89 = vld [vmem:[#allocation5 + $0xd8] sm:$0xff]
    %v90 = vld [vmem:[#allocation5 + $0xe0] sm:$0xff]
    %v91 = vld [vmem:[#allocation5 + $0xe8] sm:$0xff]
    %v92 = vld [vmem:[#allocation5 + $0xf0] sm:$0xff]
    %v93 = vld [vmem:[#allocation5 + $0xf8] sm:$0xff]
    %v94 = vld [vmem:[#allocation5 + $0x100] sm:$0xff]
    %v95 = vld [vmem:[#allocation5 + $0x108] sm:$0xff]
    %v96 = vld [vmem:[#allocation5 + $0x110] sm:$0xff]
    %v97 = vld [vmem:[#allocation5 + $0x118] sm:$0xff]
    %v98 = vld [vmem:[#allocation5 + $0x120] sm:$0xff]
    %v99 = vld [vmem:[#allocation5 + $0x128] sm:$0xff]
    %v100 = vld [vmem:[#allocation5 + $0x130] sm:$0xff]
    %v101 = vld [vmem:[#allocation5 + $0x138] sm:$0xff]
    %v102 = vld [vmem:[#allocation5 + $0x140] sm:$0xff]
    %v103 = vld [vmem:[#allocation5 + $0x148] sm:$0xff]
    %v104 = vld [vmem:[#allocation5 + $0x150] sm:$0xff]
    %v105 = vld [vmem:[#allocation5 + $0x158] sm:$0xff]
    %v106 = vld [vmem:[#allocation5 + $0x160] sm:$0xff]
    %v107 = vld [vmem:[#allocation5 + $0x168] sm:$0xff]
    %v108 = vld [vmem:[#allocation5 + $0x170] sm:$0xff]
    %v109 = vld [vmem:[#allocation5 + $0x178] sm:$0xff]
    %v110 = vld [vmem:[#allocation5 + $0x180] sm:$0xff]
    %v111 = vld [vmem:[#allocation5 + $0x188] sm:$0xff]
    %v112 = vld [vmem:[#allocation5 + $0x190] sm:$0xff]
    %v113 = vld [vmem:[#allocation5 + $0x198] sm:$0xff]
    %v114 = vld [vmem:[#allocation5 + $0x1a0] sm:$0xff]
    %v115 = vld [vmem:[#allocation5 + $0x1a8] sm:$0xff]
    %v116 = vld [vmem:[#allocation5 + $0x1b0] sm:$0xff]
    %v117 = vld [vmem:[#allocation5 + $0x1b8] sm:$0xff]
    %v118 = vld [vmem:[#allocation5 + $0x1c0] sm:$0xff]
    %v119 = vld [vmem:[#allocation5 + $0x1c8] sm:$0xff]
    %v120 = vld [vmem:[#allocation5 + $0x1d0] sm:$0xff]
    %v121 = vld [vmem:[#allocation5 + $0x1d8] sm:$0xff]
    %v122 = vld [vmem:[#allocation5 + $0x1e0] sm:$0xff]
    %v123 = vld [vmem:[#allocation5 + $0x1e8] sm:$0xff]
    %v124 = vld [vmem:[#allocation5 + $0x1f0] sm:$0xff]
    %v125 = vld [vmem:[#allocation5 + $0x1f8] sm:$0xff]
    %v126 = vld [vmem:[#allocation5 + $0x200] sm:$0xff]
    %v127 = vld [vmem:[#allocation5 + $0x208] sm:$0xff]
    %v128 = vld [vmem:[#allocation5 + $0x210] sm:$0xff]
    %v129 = vld [vmem:[#allocation5 + $0x218] sm:$0xff]
    %v130 = vld [vmem:[#allocation5 + $0x220] sm:$0xff]
    %v131 = vld [vmem:[#allocation5 + $0x228] sm:$0xff]
    %v132 = vld [vmem:[#allocation5 + $0x230] sm:$0xff]
    %v133 = vld [vmem:[#allocation5 + $0x238] sm:$0xff]
    %v134 = vld [vmem:[#allocation5 + $0x240] sm:$0xff]
    %v135 = vld [vmem:[#allocation5 + $0x248] sm:$0xff]
    %v136 = vld [vmem:[#allocation5 + $0x250] sm:$0xff]
    %v137 = vld [vmem:[#allocation5 + $0x258] sm:$0xff]
    %v138 = vld [vmem:[#allocation5 + $0x260] sm:$0xff]
    %v139 = vld [vmem:[#allocation5 + $0x268] sm:$0xff]
    %v140 = vld [vmem:[#allocation5 + $0x270] sm:$0xff]
    %v141 = vld [vmem:[#allocation5 + $0x278] sm:$0xff]
    %v142 = vld [vmem:[#allocation5 + $0x280] sm:$0xff]
    %v143 = vld [vmem:[#allocation5 + $0x288] sm:$0xff]
    %v144 = vld [vmem:[#allocation5 + $0x290] sm:$0xff]
    %v145 = vld [vmem:[#allocation5 + $0x298] sm:$0xff]
    %v146 = vld [vmem:[#allocation5 + $0x2a0] sm:$0xff]
    %v147 = vld [vmem:[#allocation5 + $0x2a8] sm:$0xff]
    %v148 = vld [vmem:[#allocation5 + $0x2b0] sm:$0xff]
    %v149 = vld [vmem:[#allocation5 + $0x2b8] sm:$0xff]
    %v150 = vld [vmem:[#allocation5 + $0x2c0] sm:$0xff]
    %v151 = vld [vmem:[#allocation5 + $0x2c8] sm:$0xff]
    %v152 = vld [vmem:[#allocation5 + $0x2d0] sm:$0xff]
    %v153 = vld [vmem:[#allocation5 + $0x2d8] sm:$0xff]
    %v154 = vld [vmem:[#allocation5 + $0x2e0] sm:$0xff]
    %v155 = vld [vmem:[#allocation5 + $0x2e8] sm:$0xff]
    %v156 = vld [vmem:[#allocation5 + $0x2f0] sm:$0xff]
    %v157 = vld [vmem:[#allocation5 + $0x2f8] sm:$0xff]
    %v158 = vld [vmem:[#allocation5 + $0x300] sm:$0xff]
    %v159 = vld [vmem:[#allocation5 + $0x308] sm:$0xff]
    %v160 = vld [vmem:[#allocation5 + $0x310] sm:$0xff]
    %v161 = vld [vmem:[#allocation5 + $0x318] sm:$0xff]
    %v162 = vld [vmem:[#allocation5 + $0x320] sm:$0xff]
    %v163 = vld [vmem:[#allocation5 + $0x328] sm:$0xff]
    %v164 = vld [vmem:[#allocation5 + $0x330] sm:$0xff]
    %v165 = vld [vmem:[#allocation5 + $0x338] sm:$0xff]
    %v166 = vld [vmem:[#allocation5 + $0x340] sm:$0xff]
    %v167 = vld [vmem:[#allocation5 + $0x348] sm:$0xff]
    %v168 = vld [vmem:[#allocation5 + $0x350] sm:$0xff]
    %v169 = vld [vmem:[#allocation5 + $0x358] sm:$0xff]
    %v170 = vld [vmem:[#allocation5 + $0x360] sm:$0xff]
    %v171 = vld [vmem:[#allocation5 + $0x368] sm:$0xff]
    %v172 = vld [vmem:[#allocation5 + $0x370] sm:$0xff]
    %v173 = vld [vmem:[#allocation5 + $0x378] sm:$0xff]
    %v174 = vld [vmem:[#allocation5 + $0x380] sm:$0xff]
    %v175 = vld [vmem:[#allocation5 + $0x388] sm:$0xff]
    %v176 = vld [vmem:[#allocation5 + $0x390] sm:$0xff]
    %v177 = vld [vmem:[#allocation5 + $0x398] sm:$0xff]
    %v178 = vld [vmem:[#allocation5 + $0x3a0] sm:$0xff]
    %v179 = vld [vmem:[#allocation5 + $0x3a8] sm:$0xff]
    %v180 = vld [vmem:[#allocation5 + $0x3b0] sm:$0xff]
    %v181 = vld [vmem:[#allocation5 + $0x3b8] sm:$0xff]
    %v182 = vld [vmem:[#allocation5 + $0x3c0] sm:$0xff]
    %v183 = vld [vmem:[#allocation5 + $0x3c8] sm:$0xff]
    %v184 = vld [vmem:[#allocation5 + $0x3d0] sm:$0xff]
    %v185 = vld [vmem:[#allocation5 + $0x3d8] sm:$0xff]
    %v186 = vld [vmem:[#allocation5 + $0x3e0] sm:$0xff]
    %v187 = vld [vmem:[#allocation5 + $0x3e8] sm:$0xff]
    %v188 = vld [vmem:[#allocation5 + $0x3f0] sm:$0xff]
    %v189 = vld [vmem:[#allocation5 + $0x3f8] sm:$0xff]
    %v190 = vld [vmem:[#allocation5 + $0x400] sm:$0xff]
    %v191 = vld [vmem:[#allocation5 + $0x408] sm:$0xff]
    %v192 = vld [vmem:[#allocation5 + $0x410] sm:$0xff]
    %v193 = vld [vmem:[#allocation5 + $0x418] sm:$0xff]
    %v194 = vld [vmem:[#allocation5 + $0x420] sm:$0xff]
    %v195 = vld [vmem:[#allocation5 + $0x428] sm:$0xff]
    %v196 = vld [vmem:[#allocation5 + $0x430] sm:$0xff]
    %v197 = vld [vmem:[#allocation5 + $0x438] sm:$0xff]
    %v198 = vld [vmem:[#allocation5 + $0x440] sm:$0xff]
    %v199 = vld [vmem:[#allocation5 + $0x448] sm:$0xff]
    %v200 = vld [vmem:[#allocation5 + $0x450] sm:$0xff]
    %v201 = vld [vmem:[#allocation5 + $0x458] sm:$0xff]
    %v202 = vld [vmem:[#allocation5 + $0x460] sm:$0xff]
    %v203 = vld [vmem:[#allocation5 + $0x468] sm:$0xff]
    %v204 = vld [vmem:[#allocation5 + $0x470] sm:$0xff]
    %v205 = vld [vmem:[#allocation5 + $0x478] sm:$0xff]
    %v206 = vld [vmem:[#allocation5 + $0x480] sm:$0xff]
    %v207 = vld [vmem:[#allocation5 + $0x488] sm:$0xff]
    %v208 = vld [vmem:[#allocation5 + $0x490] sm:$0xff]
    %v209 = vld [vmem:[#allocation5 + $0x498] sm:$0xff]
    %v210 = vld [vmem:[#allocation5 + $0x4a0] sm:$0xff]
    %v211 = vld [vmem:[#allocation5 + $0x4a8] sm:$0xff]
    %v212 = vld [vmem:[#allocation5 + $0x4b0] sm:$0xff]
    %v213 = vld [vmem:[#allocation5 + $0x4b8] sm:$0xff]
    %v214 = vld [vmem:[#allocation5 + $0x4c0] sm:$0xff]
    %v215 = vld [vmem:[#allocation5 + $0x4c8] sm:$0xff]
    %v216 = vld [vmem:[#allocation5 + $0x4d0] sm:$0xff]
    %v217 = vld [vmem:[#allocation5 + $0x4d8] sm:$0xff]
    %v218 = vld [vmem:[#allocation5 + $0x4e0] sm:$0xff]
    %v219 = vld [vmem:[#allocation5 + $0x4e8] sm:$0xff]
    %v220 = vld [vmem:[#allocation5 + $0x4f0] sm:$0xff]
    %v221 = vld [vmem:[#allocation5 + $0x4f8] sm:$0xff]
    %v222 = vld [vmem:[#allocation5 + $0x500] sm:$0xff]
    %v223 = vld [vmem:[#allocation5 + $0x508] sm:$0xff]
    %v224 = vld [vmem:[#allocation5 + $0x510] sm:$0xff]
    %v225 = vld [vmem:[#allocation5 + $0x518] sm:$0xff]
    %v226 = vld [vmem:[#allocation5 + $0x520] sm:$0xff]
    %v227 = vld [vmem:[#allocation5 + $0x528] sm:$0xff]
    %v228 = vld [vmem:[#allocation5 + $0x530] sm:$0xff]
    %v229 = vld [vmem:[#allocation5 + $0x538] sm:$0xff]
    %v230 = vld [vmem:[#allocation5 + $0x540] sm:$0xff]
    %v231 = vld [vmem:[#allocation5 + $0x548] sm:$0xff]
    %v232 = vld [vmem:[#allocation5 + $0x550] sm:$0xff]
    %v233 = vld [vmem:[#allocation5 + $0x558] sm:$0xff]
    %v234 = vld [vmem:[#allocation5 + $0x560] sm:$0xff]
    %v235 = vld [vmem:[#allocation5 + $0x568] sm:$0xff]
    %v236 = vld [vmem:[#allocation5 + $0x570] sm:$0xff]
    %v237 = vld [vmem:[#allocation5 + $0x578] sm:$0xff]
    %v238 = vld [vmem:[#allocation5 + $0x580] sm:$0xff]
    %v239 = vld [vmem:[#allocation5 + $0x588] sm:$0xff]
    %v240 = vld [vmem:[#allocation5 + $0x590] sm:$0xff]
    %v241 = vld [vmem:[#allocation5 + $0x598] sm:$0xff]
    %v242 = vld [vmem:[#allocation5 + $0x5a0] sm:$0xff]
    %v243 = vld [vmem:[#allocation5 + $0x5a8] sm:$0xff]
    %v244 = vld [vmem:[#allocation5 + $0x5b0] sm:$0xff]
    %v245 = vld [vmem:[#allocation5 + $0x5b8] sm:$0xff]
    %v246 = vld [vmem:[#allocation5 + $0x5c0] sm:$0xff]
    %v247 = vld [vmem:[#allocation5 + $0x5c8] sm:$0xff]
    %v248 = vld [vmem:[#allocation5 + $0x5d0] sm:$0xff]
    %v249 = vld [vmem:[#allocation5 + $0x5d8] sm:$0xff]
    %v250 = vld [vmem:[#allocation5 + $0x5e0] sm:$0xff]
    %v251 = vld [vmem:[#allocation5 + $0x5e8] sm:$0xff]
    %v252 = vld [vmem:[#allocation5 + $0x5f0] sm:$0xff]
    %v253 = vld [vmem:[#allocation5 + $0x5f8] sm:$0xff]
    %v254 = vld [vmem:[#allocation5 + $0x600] sm:$0xff]
    %v255 = vld [vmem:[#allocation5 + $0x608] sm:$0xff]
    %v256 = vld [vmem:[#allocation5 + $0x610] sm:$0xff]
    %v257 = vld [vmem:[#allocation5 + $0x618] sm:$0xff]
    %v258 = vld [vmem:[#allocation5 + $0x620] sm:$0xff]
    %v259 = vld [vmem:[#allocation5 + $0x628] sm:$0xff]
    %v260 = vld [vmem:[#allocation5 + $0x630] sm:$0xff]
    %v261 = vld [vmem:[#allocation5 + $0x638] sm:$0xff]
    %v262 = vld [vmem:[#allocation5 + $0x640] sm:$0xff]
    %v263 = vld [vmem:[#allocation5 + $0x648] sm:$0xff]
    %v264 = vld [vmem:[#allocation5 + $0x650] sm:$0xff]
    %v265 = vld [vmem:[#allocation5 + $0x658] sm:$0xff]
    %v266 = vld [vmem:[#allocation5 + $0x660] sm:$0xff]
    %v267 = vld [vmem:[#allocation5 + $0x668] sm:$0xff]
    %v268 = vld [vmem:[#allocation5 + $0x670] sm:$0xff]
    %v269 = vld [vmem:[#allocation5 + $0x678] sm:$0xff]
    %v270 = vld [vmem:[#allocation5 + $0x680] sm:$0xff]
    %v271 = vld [vmem:[#allocation5 + $0x688] sm:$0xff]
    %v272 = vld [vmem:[#allocation5 + $0x690] sm:$0xff]
    %v273 = vld [vmem:[#allocation5 + $0x698] sm:$0xff]
    %v274 = vld [vmem:[#allocation5 + $0x6a0] sm:$0xff]
    %v275 = vld [vmem:[#allocation5 + $0x6a8] sm:$0xff]
    %v276 = vld [vmem:[#allocation5 + $0x6b0] sm:$0xff]
    %v277 = vld [vmem:[#allocation5 + $0x6b8] sm:$0xff]
    %v278 = vld [vmem:[#allocation5 + $0x6c0] sm:$0xff]
    %v279 = vld [vmem:[#allocation5 + $0x6c8] sm:$0xff]
    %v280 = vld [vmem:[#allocation5 + $0x6d0] sm:$0xff]
    %v281 = vld [vmem:[#allocation5 + $0x6d8] sm:$0xff]
    %v282 = vld [vmem:[#allocation5 + $0x6e0] sm:$0xff]
    %v283 = vld [vmem:[#allocation5 + $0x6e8] sm:$0xff]
    %v284 = vld [vmem:[#allocation5 + $0x6f0] sm:$0xff]
    %v285 = vld [vmem:[#allocation5 + $0x6f8] sm:$0xff]
    %v286 = vld [vmem:[#allocation5 + $0x700] sm:$0xff]
    %v287 = vld [vmem:[#allocation5 + $0x708] sm:$0xff]
    %v288 = vld [vmem:[#allocation5 + $0x710] sm:$0xff]
    %v289 = vld [vmem:[#allocation5 + $0x718] sm:$0xff]
    %v290 = vld [vmem:[#allocation5 + $0x720] sm:$0xff]
    %v291 = vld [vmem:[#allocation5 + $0x728] sm:$0xff]
    %v292 = vld [vmem:[#allocation5 + $0x730] sm:$0xff]
    %v293 = vld [vmem:[#allocation5 + $0x738] sm:$0xff]
    %v294 = vld [vmem:[#allocation5 + $0x740] sm:$0xff]
    %v295 = vld [vmem:[#allocation5 + $0x748] sm:$0xff]
    %v296 = vld [vmem:[#allocation5 + $0x750] sm:$0xff]
    %v297 = vld [vmem:[#allocation5 + $0x758] sm:$0xff]
    %v298 = vld [vmem:[#allocation5 + $0x760] sm:$0xff]
    %v299 = vld [vmem:[#allocation5 + $0x768] sm:$0xff]
    %v300 = vld [vmem:[#allocation5 + $0x770] sm:$0xff]
    %v301 = vld [vmem:[#allocation5 + $0x778] sm:$0xff]
    %v302 = vld [vmem:[#allocation5 + $0x780] sm:$0xff]
    %v303 = vld [vmem:[#allocation5 + $0x788] sm:$0xff]
    %v304 = vld [vmem:[#allocation5 + $0x790] sm:$0xff]
    %v305 = vld [vmem:[#allocation5 + $0x798] sm:$0xff]
    %v306 = vld [vmem:[#allocation5 + $0x7a0] sm:$0xff]
    %v307 = vld [vmem:[#allocation5 + $0x7a8] sm:$0xff]
    %v308 = vld [vmem:[#allocation5 + $0x7b0] sm:$0xff]
    %v309 = vld [vmem:[#allocation5 + $0x7b8] sm:$0xff]
    %v310 = vld [vmem:[#allocation5 + $0x7c0] sm:$0xff]
    %v311 = vld [vmem:[#allocation5 + $0x7c8] sm:$0xff]
    %v312 = vld [vmem:[#allocation5 + $0x7d0] sm:$0xff]
    %v313 = vld [vmem:[#allocation5 + $0x7d8] sm:$0xff]
    %v314 = vld [vmem:[#allocation5 + $0x7e0] sm:$0xff]
    %v315 = vld [vmem:[#allocation5 + $0x7e8] sm:$0xff]
    %v316 = vld [vmem:[#allocation5 + $0x7f0] sm:$0xff]
    %v317 = vld [vmem:[#allocation5 + $0x7f8] sm:$0xff]
    %v318 = vld [vmem:[#allocation5 + $0x800] sm:$0xff]
    %v319 = vld [vmem:[#allocation5 + $0x808] sm:$0xff]
    %v320 = vld [vmem:[#allocation5 + $0x810] sm:$0xff]
    %v321 = vld [vmem:[#allocation5 + $0x818] sm:$0xff]
    %v322 = vld [vmem:[#allocation5 + $0x820] sm:$0xff]
    %v323 = vld [vmem:[#allocation5 + $0x828] sm:$0xff]
    %v324 = vld [vmem:[#allocation5 + $0x830] sm:$0xff]
    %v325 = vld [vmem:[#allocation5 + $0x838] sm:$0xff]
    %v326 = vld [vmem:[#allocation5 + $0x840] sm:$0xff]
    %v327 = vld [vmem:[#allocation5 + $0x848] sm:$0xff]
    %v328 = vld [vmem:[#allocation5 + $0x850] sm:$0xff]
    %v329 = vld [vmem:[#allocation5 + $0x858] sm:$0xff]
    %v330 = vld [vmem:[#allocation5 + $0x860] sm:$0xff]
    %v331 = vld [vmem:[#allocation5 + $0x868] sm:$0xff]
    %v332 = vld [vmem:[#allocation5 + $0x870] sm:$0xff]
    %v333 = vld [vmem:[#allocation5 + $0x878] sm:$0xff]
    %v334 = vld [vmem:[#allocation5 + $0x880] sm:$0xff]
    %v335 = vld [vmem:[#allocation5 + $0x888] sm:$0xff]
    %v336 = vld [vmem:[#allocation5 + $0x890] sm:$0xff]
    %v337 = vld [vmem:[#allocation5 + $0x898] sm:$0xff]
    %v338 = vld [vmem:[#allocation5 + $0x8a0] sm:$0xff]
    %v339 = vld [vmem:[#allocation5 + $0x8a8] sm:$0xff]
    %v340 = vld [vmem:[#allocation5 + $0x8b0] sm:$0xff]
    %v341 = vld [vmem:[#allocation5 + $0x8b8] sm:$0xff]
    %v342 = vld [vmem:[#allocation5 + $0x8c0] sm:$0xff]
    %v343 = vld [vmem:[#allocation5 + $0x8c8] sm:$0xff]
    %v344 = vld [vmem:[#allocation5 + $0x8d0] sm:$0xff]
    %v345 = vld [vmem:[#allocation5 + $0x8d8] sm:$0xff]
    %v346 = vld [vmem:[#allocation5 + $0x8e0] sm:$0xff]
    %v347 = vld [vmem:[#allocation5 + $0x8e8] sm:$0xff]
    %v348 = vld [vmem:[#allocation5 + $0x8f0] sm:$0xff]
    %v349 = vld [vmem:[#allocation5 + $0x8f8] sm:$0xff]
    %v352 = vlaneseq
    %v353 = vshrl.u32 %v352, 7
    %v354 = vsub.s32 0, %v353
    %v355 = vrot.slane %v60, %v354
    %v356 = vlaneseq
    %v357 = vshrl.u32 %v356, 7
    %v358 = vsub.s32 2, %v357
    %v359 = vrot.slane %v60, %v358
    %v360 = vlaneseq
    %v361 = vshrl.u32 %v360, 7
    %v362 = vsub.s32 4, %v361
    %v363 = vrot.slane %v60, %v362
    %v364 = vlaneseq
    %v365 = vshrl.u32 %v364, 7
    %v366 = vsub.s32 6, %v365
    %v367 = vrot.slane %v60, %v366
    %v368 = vlaneseq
    %v369 = vshrl.u32 %v368, 7
    %v370 = vsub.s32 0, %v369
    %v371 = vrot.slane %v61, %v370
    %v372 = vlaneseq
    %v373 = vshrl.u32 %v372, 7
    %v374 = vsub.s32 2, %v373
    %v375 = vrot.slane %v61, %v374
    %v382 = vlaneseq
    %v383 = vshrl.u32 %v382, 7
    %v384 = vsub.s32 0, %v383
    %v385 = vrot.slane %v355, %v384
    %v386 = vlaneseq
    %v387 = vshrl.u32 %v386, 7
    %v388 = vsub.s32 0, %v387
    %v389 = vrot.slane %v359, %v388
    %v390 = vlaneseq
    %v391 = vshrl.u32 %v390, 7
    %v392 = vsub.s32 0, %v391
    %v393 = vrot.slane %v363, %v392
    %v394 = vlaneseq
    %v395 = vshrl.u32 %v394, 7
    %v396 = vsub.s32 0, %v395
    %v397 = vrot.slane %v367, %v396
    %v398 = vlaneseq
    %v399 = vshrl.u32 %v398, 7
    %v400 = vsub.s32 0, %v399
    %v401 = vrot.slane %v371, %v400
    %v402 = vlaneseq
    %v403 = vshrl.u32 %v402, 7
    %v404 = vsub.s32 0, %v403
    %v405 = vrot.slane %v375, %v404
    %v412 = vunpack.c.l.b16 %v54
    %v413 = vunpack.c.h.b16 %v54
    %v414 = vunpack.c.l.b16 %v55
    %v415 = vunpack.c.h.b16 %v55
    %v416 = vunpack.c.l.b16 %v56
    %v417 = vunpack.c.h.b16 %v56
    %v418 = vunpack.c.l.b16 %v57
    %v419 = vunpack.c.h.b16 %v57
    %v420 = vunpack.c.l.b16 %v58
    %v421 = vunpack.c.h.b16 %v58
    %v422 = vunpack.c.l.b16 %v59
    %v423 = vunpack.c.h.b16 %v59
    %v424 = vpack.c.b16 %v418, %v412
    %v425 = vpack.c.b16 %v419, %v413
    %v426 = vpack.c.b16 %v420, %v414
    %v427 = vpack.c.b16 %v421, %v415
    %v428 = vpack.c.b16 %v422, %v416
    %v429 = vpack.c.b16 %v423, %v417
    %v724 = vunpack.c.l.b16 %v62
    %v725 = vunpack.c.h.b16 %v62
    %v726 = vunpack.c.l.b16 %v63
    %v727 = vunpack.c.h.b16 %v63
    %v728 = vunpack.c.l.b16 %v64
    %v729 = vunpack.c.h.b16 %v64
    %v730 = vunpack.c.l.b16 %v65
    %v731 = vunpack.c.h.b16 %v65
    %v732 = vunpack.c.l.b16 %v66
    %v733 = vunpack.c.h.b16 %v66
    %v734 = vunpack.c.l.b16 %v67
    %v735 = vunpack.c.h.b16 %v67
    %v736 = vunpack.c.l.b16 %v68
    %v737 = vunpack.c.h.b16 %v68
    %v738 = vunpack.c.l.b16 %v69
    %v739 = vunpack.c.h.b16 %v69
    %v740 = vunpack.c.l.b16 %v70
    %v741 = vunpack.c.h.b16 %v70
    %v742 = vunpack.c.l.b16 %v71
    %v743 = vunpack.c.h.b16 %v71
    %v744 = vunpack.c.l.b16 %v72
    %v745 = vunpack.c.h.b16 %v72
    %v746 = vunpack.c.l.b16 %v73
    %v747 = vunpack.c.h.b16 %v73
    %v748 = vunpack.c.l.b16 %v74
    %v749 = vunpack.c.h.b16 %v74
    %v750 = vunpack.c.l.b16 %v75
    %v751 = vunpack.c.h.b16 %v75
    %v752 = vunpack.c.l.b16 %v76
    %v753 = vunpack.c.h.b16 %v76
    %v754 = vunpack.c.l.b16 %v77
    %v755 = vunpack.c.h.b16 %v77
    %v756 = vunpack.c.l.b16 %v78
    %v757 = vunpack.c.h.b16 %v78
    %v758 = vunpack.c.l.b16 %v79
    %v759 = vunpack.c.h.b16 %v79
    %v760 = vunpack.c.l.b16 %v80
    %v761 = vunpack.c.h.b16 %v80
    %v762 = vunpack.c.l.b16 %v81
    %v763 = vunpack.c.h.b16 %v81
    %v764 = vunpack.c.l.b16 %v82
    %v765 = vunpack.c.h.b16 %v82
    %v766 = vunpack.c.l.b16 %v83
    %v767 = vunpack.c.h.b16 %v83
    %v768 = vunpack.c.l.b16 %v84
    %v769 = vunpack.c.h.b16 %v84
    %v770 = vunpack.c.l.b16 %v85
    %v771 = vunpack.c.h.b16 %v85
    %v772 = vunpack.c.l.b16 %v86
    %v773 = vunpack.c.h.b16 %v86
    %v774 = vunpack.c.l.b16 %v87
    %v775 = vunpack.c.h.b16 %v87
    %v776 = vunpack.c.l.b16 %v88
    %v777 = vunpack.c.h.b16 %v88
    %v778 = vunpack.c.l.b16 %v89
    %v779 = vunpack.c.h.b16 %v89
    %v780 = vunpack.c.l.b16 %v90
    %v781 = vunpack.c.h.b16 %v90
    %v782 = vunpack.c.l.b16 %v91
    %v783 = vunpack.c.h.b16 %v91
    %v784 = vunpack.c.l.b16 %v92
    %v785 = vunpack.c.h.b16 %v92
    %v786 = vunpack.c.l.b16 %v93
    %v787 = vunpack.c.h.b16 %v93
    %v788 = vunpack.c.l.b16 %v94
    %v789 = vunpack.c.h.b16 %v94
    %v790 = vunpack.c.l.b16 %v95
    %v791 = vunpack.c.h.b16 %v95
    %v792 = vunpack.c.l.b16 %v96
    %v793 = vunpack.c.h.b16 %v96
    %v794 = vunpack.c.l.b16 %v97
    %v795 = vunpack.c.h.b16 %v97
    %v796 = vunpack.c.l.b16 %v98
    %v797 = vunpack.c.h.b16 %v98
    %v798 = vunpack.c.l.b16 %v99
    %v799 = vunpack.c.h.b16 %v99
    %v800 = vunpack.c.l.b16 %v100
    %v801 = vunpack.c.h.b16 %v100
    %v802 = vunpack.c.l.b16 %v101
    %v803 = vunpack.c.h.b16 %v101
    %v804 = vunpack.c.l.b16 %v102
    %v805 = vunpack.c.h.b16 %v102
    %v806 = vunpack.c.l.b16 %v103
    %v807 = vunpack.c.h.b16 %v103
    %v808 = vunpack.c.l.b16 %v104
    %v809 = vunpack.c.h.b16 %v104
    %v810 = vunpack.c.l.b16 %v105
    %v811 = vunpack.c.h.b16 %v105
    %v812 = vunpack.c.l.b16 %v106
    %v813 = vunpack.c.h.b16 %v106
    %v814 = vunpack.c.l.b16 %v107
    %v815 = vunpack.c.h.b16 %v107
    %v816 = vunpack.c.l.b16 %v108
    %v817 = vunpack.c.h.b16 %v108
    %v818 = vunpack.c.l.b16 %v109
    %v819 = vunpack.c.h.b16 %v109
    %v820 = vunpack.c.l.b16 %v110
    %v821 = vunpack.c.h.b16 %v110
    %v822 = vunpack.c.l.b16 %v111
    %v823 = vunpack.c.h.b16 %v111
    %v824 = vunpack.c.l.b16 %v112
    %v825 = vunpack.c.h.b16 %v112
    %v826 = vunpack.c.l.b16 %v113
    %v827 = vunpack.c.h.b16 %v113
    %v828 = vunpack.c.l.b16 %v114
    %v829 = vunpack.c.h.b16 %v114
    %v830 = vunpack.c.l.b16 %v115
    %v831 = vunpack.c.h.b16 %v115
    %v832 = vunpack.c.l.b16 %v116
    %v833 = vunpack.c.h.b16 %v116
    %v834 = vunpack.c.l.b16 %v117
    %v835 = vunpack.c.h.b16 %v117
    %v836 = vunpack.c.l.b16 %v118
    %v837 = vunpack.c.h.b16 %v118
    %v838 = vunpack.c.l.b16 %v119
    %v839 = vunpack.c.h.b16 %v119
    %v840 = vunpack.c.l.b16 %v120
    %v841 = vunpack.c.h.b16 %v120
    %v842 = vunpack.c.l.b16 %v121
    %v843 = vunpack.c.h.b16 %v121
    %v844 = vunpack.c.l.b16 %v122
    %v845 = vunpack.c.h.b16 %v122
    %v846 = vunpack.c.l.b16 %v123
    %v847 = vunpack.c.h.b16 %v123
    %v848 = vunpack.c.l.b16 %v124
    %v849 = vunpack.c.h.b16 %v124
    %v850 = vunpack.c.l.b16 %v125
    %v851 = vunpack.c.h.b16 %v125
    %v852 = vunpack.c.l.b16 %v126
    %v853 = vunpack.c.h.b16 %v126
    %v854 = vunpack.c.l.b16 %v127
    %v855 = vunpack.c.h.b16 %v127
    %v856 = vunpack.c.l.b16 %v128
    %v857 = vunpack.c.h.b16 %v128
    %v858 = vunpack.c.l.b16 %v129
    %v859 = vunpack.c.h.b16 %v129
    %v860 = vunpack.c.l.b16 %v130
    %v861 = vunpack.c.h.b16 %v130
    %v862 = vunpack.c.l.b16 %v131
    %v863 = vunpack.c.h.b16 %v131
    %v864 = vunpack.c.l.b16 %v132
    %v865 = vunpack.c.h.b16 %v132
    %v866 = vunpack.c.l.b16 %v133
    %v867 = vunpack.c.h.b16 %v133
    %v868 = vunpack.c.l.b16 %v134
    %v869 = vunpack.c.h.b16 %v134
    %v870 = vunpack.c.l.b16 %v135
    %v871 = vunpack.c.h.b16 %v135
    %v872 = vunpack.c.l.b16 %v136
    %v873 = vunpack.c.h.b16 %v136
    %v874 = vunpack.c.l.b16 %v137
    %v875 = vunpack.c.h.b16 %v137
    %v876 = vunpack.c.l.b16 %v138
    %v877 = vunpack.c.h.b16 %v138
    %v878 = vunpack.c.l.b16 %v139
    %v879 = vunpack.c.h.b16 %v139
    %v880 = vunpack.c.l.b16 %v140
    %v881 = vunpack.c.h.b16 %v140
    %v882 = vunpack.c.l.b16 %v141
    %v883 = vunpack.c.h.b16 %v141
    %v884 = vunpack.c.l.b16 %v142
    %v885 = vunpack.c.h.b16 %v142
    %v886 = vunpack.c.l.b16 %v143
    %v887 = vunpack.c.h.b16 %v143
    %v888 = vunpack.c.l.b16 %v144
    %v889 = vunpack.c.h.b16 %v144
    %v890 = vunpack.c.l.b16 %v145
    %v891 = vunpack.c.h.b16 %v145
    %v892 = vunpack.c.l.b16 %v146
    %v893 = vunpack.c.h.b16 %v146
    %v894 = vunpack.c.l.b16 %v147
    %v895 = vunpack.c.h.b16 %v147
    %v896 = vunpack.c.l.b16 %v148
    %v897 = vunpack.c.h.b16 %v148
    %v898 = vunpack.c.l.b16 %v149
    %v899 = vunpack.c.h.b16 %v149
    %v900 = vunpack.c.l.b16 %v150
    %v901 = vunpack.c.h.b16 %v150
    %v902 = vunpack.c.l.b16 %v151
    %v903 = vunpack.c.h.b16 %v151
    %v904 = vunpack.c.l.b16 %v152
    %v905 = vunpack.c.h.b16 %v152
    %v906 = vunpack.c.l.b16 %v153
    %v907 = vunpack.c.h.b16 %v153
    %v908 = vunpack.c.l.b16 %v154
    %v909 = vunpack.c.h.b16 %v154
    %v910 = vunpack.c.l.b16 %v155
    %v911 = vunpack.c.h.b16 %v155
    %v912 = vunpack.c.l.b16 %v156
    %v913 = vunpack.c.h.b16 %v156
    %v914 = vunpack.c.l.b16 %v157
    %v915 = vunpack.c.h.b16 %v157
    %v916 = vunpack.c.l.b16 %v158
    %v917 = vunpack.c.h.b16 %v158
    %v918 = vunpack.c.l.b16 %v159
    %v919 = vunpack.c.h.b16 %v159
    %v920 = vunpack.c.l.b16 %v160
    %v921 = vunpack.c.h.b16 %v160
    %v922 = vunpack.c.l.b16 %v161
    %v923 = vunpack.c.h.b16 %v161
    %v924 = vunpack.c.l.b16 %v162
    %v925 = vunpack.c.h.b16 %v162
    %v926 = vunpack.c.l.b16 %v163
    %v927 = vunpack.c.h.b16 %v163
    %v928 = vunpack.c.l.b16 %v164
    %v929 = vunpack.c.h.b16 %v164
    %v930 = vunpack.c.l.b16 %v165
    %v931 = vunpack.c.h.b16 %v165
    %v932 = vunpack.c.l.b16 %v166
    %v933 = vunpack.c.h.b16 %v166
    %v934 = vunpack.c.l.b16 %v167
    %v935 = vunpack.c.h.b16 %v167
    %v936 = vunpack.c.l.b16 %v168
    %v937 = vunpack.c.h.b16 %v168
    %v938 = vunpack.c.l.b16 %v169
    %v939 = vunpack.c.h.b16 %v169
    %v940 = vunpack.c.l.b16 %v170
    %v941 = vunpack.c.h.b16 %v170
    %v942 = vunpack.c.l.b16 %v171
    %v943 = vunpack.c.h.b16 %v171
    %v944 = vunpack.c.l.b16 %v172
    %v945 = vunpack.c.h.b16 %v172
    %v946 = vunpack.c.l.b16 %v173
    %v947 = vunpack.c.h.b16 %v173
    %v948 = vunpack.c.l.b16 %v174
    %v949 = vunpack.c.h.b16 %v174
    %v950 = vunpack.c.l.b16 %v175
    %v951 = vunpack.c.h.b16 %v175
    %v952 = vunpack.c.l.b16 %v176
    %v953 = vunpack.c.h.b16 %v176
    %v954 = vunpack.c.l.b16 %v177
    %v955 = vunpack.c.h.b16 %v177
    %v956 = vunpack.c.l.b16 %v178
    %v957 = vunpack.c.h.b16 %v178
    %v958 = vunpack.c.l.b16 %v179
    %v959 = vunpack.c.h.b16 %v179
    %v960 = vunpack.c.l.b16 %v180
    %v961 = vunpack.c.h.b16 %v180
    %v962 = vunpack.c.l.b16 %v181
    %v963 = vunpack.c.h.b16 %v181
    %v964 = vunpack.c.l.b16 %v182
    %v965 = vunpack.c.h.b16 %v182
    %v966 = vunpack.c.l.b16 %v183
    %v967 = vunpack.c.h.b16 %v183
    %v968 = vunpack.c.l.b16 %v184
    %v969 = vunpack.c.h.b16 %v184
    %v970 = vunpack.c.l.b16 %v185
    %v971 = vunpack.c.h.b16 %v185
    %v972 = vunpack.c.l.b16 %v186
    %v973 = vunpack.c.h.b16 %v186
    %v974 = vunpack.c.l.b16 %v187
    %v975 = vunpack.c.h.b16 %v187
    %v976 = vunpack.c.l.b16 %v188
    %v977 = vunpack.c.h.b16 %v188
    %v978 = vunpack.c.l.b16 %v189
    %v979 = vunpack.c.h.b16 %v189
    %v980 = vunpack.c.l.b16 %v190
    %v981 = vunpack.c.h.b16 %v190
    %v982 = vunpack.c.l.b16 %v191
    %v983 = vunpack.c.h.b16 %v191
    %v984 = vunpack.c.l.b16 %v192
    %v985 = vunpack.c.h.b16 %v192
    %v986 = vunpack.c.l.b16 %v193
    %v987 = vunpack.c.h.b16 %v193
    %v988 = vunpack.c.l.b16 %v194
    %v989 = vunpack.c.h.b16 %v194
    %v990 = vunpack.c.l.b16 %v195
    %v991 = vunpack.c.h.b16 %v195
    %v992 = vunpack.c.l.b16 %v196
    %v993 = vunpack.c.h.b16 %v196
    %v994 = vunpack.c.l.b16 %v197
    %v995 = vunpack.c.h.b16 %v197
    %v996 = vunpack.c.l.b16 %v198
    %v997 = vunpack.c.h.b16 %v198
    %v998 = vunpack.c.l.b16 %v199
    %v999 = vunpack.c.h.b16 %v199
    %v1000 = vunpack.c.l.b16 %v200
    %v1001 = vunpack.c.h.b16 %v200
    %v1002 = vunpack.c.l.b16 %v201
    %v1003 = vunpack.c.h.b16 %v201
    %v1004 = vunpack.c.l.b16 %v202
    %v1005 = vunpack.c.h.b16 %v202
    %v1006 = vunpack.c.l.b16 %v203
    %v1007 = vunpack.c.h.b16 %v203
    %v1008 = vunpack.c.l.b16 %v204
    %v1009 = vunpack.c.h.b16 %v204
    %v1010 = vunpack.c.l.b16 %v205
    %v1011 = vunpack.c.h.b16 %v205
    %v1012 = vunpack.c.l.b16 %v206
    %v1013 = vunpack.c.h.b16 %v206
    %v1014 = vunpack.c.l.b16 %v207
    %v1015 = vunpack.c.h.b16 %v207
    %v1016 = vunpack.c.l.b16 %v208
    %v1017 = vunpack.c.h.b16 %v208
    %v1018 = vunpack.c.l.b16 %v209
    %v1019 = vunpack.c.h.b16 %v209
    %v1020 = vunpack.c.l.b16 %v210
    %v1021 = vunpack.c.h.b16 %v210
    %v1022 = vunpack.c.l.b16 %v211
    %v1023 = vunpack.c.h.b16 %v211
    %v1024 = vunpack.c.l.b16 %v212
    %v1025 = vunpack.c.h.b16 %v212
    %v1026 = vunpack.c.l.b16 %v213
    %v1027 = vunpack.c.h.b16 %v213
    %v1028 = vunpack.c.l.b16 %v214
    %v1029 = vunpack.c.h.b16 %v214
    %v1030 = vunpack.c.l.b16 %v215
    %v1031 = vunpack.c.h.b16 %v215
    %v1032 = vunpack.c.l.b16 %v216
    %v1033 = vunpack.c.h.b16 %v216
    %v1034 = vunpack.c.l.b16 %v217
    %v1035 = vunpack.c.h.b16 %v217
    %v1036 = vunpack.c.l.b16 %v218
    %v1037 = vunpack.c.h.b16 %v218
    %v1038 = vunpack.c.l.b16 %v219
    %v1039 = vunpack.c.h.b16 %v219
    %v1040 = vunpack.c.l.b16 %v220
    %v1041 = vunpack.c.h.b16 %v220
    %v1042 = vunpack.c.l.b16 %v221
    %v1043 = vunpack.c.h.b16 %v221
    %v1044 = vunpack.c.l.b16 %v222
    %v1045 = vunpack.c.h.b16 %v222
    %v1046 = vunpack.c.l.b16 %v223
    %v1047 = vunpack.c.h.b16 %v223
    %v1048 = vunpack.c.l.b16 %v224
    %v1049 = vunpack.c.h.b16 %v224
    %v1050 = vunpack.c.l.b16 %v225
    %v1051 = vunpack.c.h.b16 %v225
    %v1052 = vunpack.c.l.b16 %v226
    %v1053 = vunpack.c.h.b16 %v226
    %v1054 = vunpack.c.l.b16 %v227
    %v1055 = vunpack.c.h.b16 %v227
    %v1056 = vunpack.c.l.b16 %v228
    %v1057 = vunpack.c.h.b16 %v228
    %v1058 = vunpack.c.l.b16 %v229
    %v1059 = vunpack.c.h.b16 %v229
    %v1060 = vunpack.c.l.b16 %v230
    %v1061 = vunpack.c.h.b16 %v230
    %v1062 = vunpack.c.l.b16 %v231
    %v1063 = vunpack.c.h.b16 %v231
    %v1064 = vunpack.c.l.b16 %v232
    %v1065 = vunpack.c.h.b16 %v232
    %v1066 = vunpack.c.l.b16 %v233
    %v1067 = vunpack.c.h.b16 %v233
    %v1068 = vunpack.c.l.b16 %v234
    %v1069 = vunpack.c.h.b16 %v234
    %v1070 = vunpack.c.l.b16 %v235
    %v1071 = vunpack.c.h.b16 %v235
    %v1072 = vunpack.c.l.b16 %v236
    %v1073 = vunpack.c.h.b16 %v236
    %v1074 = vunpack.c.l.b16 %v237
    %v1075 = vunpack.c.h.b16 %v237
    %v1076 = vunpack.c.l.b16 %v238
    %v1077 = vunpack.c.h.b16 %v238
    %v1078 = vunpack.c.l.b16 %v239
    %v1079 = vunpack.c.h.b16 %v239
    %v1080 = vunpack.c.l.b16 %v240
    %v1081 = vunpack.c.h.b16 %v240
    %v1082 = vunpack.c.l.b16 %v241
    %v1083 = vunpack.c.h.b16 %v241
    %v1084 = vunpack.c.l.b16 %v242
    %v1085 = vunpack.c.h.b16 %v242
    %v1086 = vunpack.c.l.b16 %v243
    %v1087 = vunpack.c.h.b16 %v243
    %v1088 = vunpack.c.l.b16 %v244
    %v1089 = vunpack.c.h.b16 %v244
    %v1090 = vunpack.c.l.b16 %v245
    %v1091 = vunpack.c.h.b16 %v245
    %v1092 = vunpack.c.l.b16 %v246
    %v1093 = vunpack.c.h.b16 %v246
    %v1094 = vunpack.c.l.b16 %v247
    %v1095 = vunpack.c.h.b16 %v247
    %v1096 = vunpack.c.l.b16 %v248
    %v1097 = vunpack.c.h.b16 %v248
    %v1098 = vunpack.c.l.b16 %v249
    %v1099 = vunpack.c.h.b16 %v249
    %v1100 = vunpack.c.l.b16 %v250
    %v1101 = vunpack.c.h.b16 %v250
    %v1102 = vunpack.c.l.b16 %v251
    %v1103 = vunpack.c.h.b16 %v251
    %v1104 = vunpack.c.l.b16 %v252
    %v1105 = vunpack.c.h.b16 %v252
    %v1106 = vunpack.c.l.b16 %v253
    %v1107 = vunpack.c.h.b16 %v253
    %v1108 = vunpack.c.l.b16 %v254
    %v1109 = vunpack.c.h.b16 %v254
    %v1110 = vunpack.c.l.b16 %v255
    %v1111 = vunpack.c.h.b16 %v255
    %v1112 = vunpack.c.l.b16 %v256
    %v1113 = vunpack.c.h.b16 %v256
    %v1114 = vunpack.c.l.b16 %v257
    %v1115 = vunpack.c.h.b16 %v257
    %v1116 = vunpack.c.l.b16 %v258
    %v1117 = vunpack.c.h.b16 %v258
    %v1118 = vunpack.c.l.b16 %v259
    %v1119 = vunpack.c.h.b16 %v259
    %v1120 = vunpack.c.l.b16 %v260
    %v1121 = vunpack.c.h.b16 %v260
    %v1122 = vunpack.c.l.b16 %v261
    %v1123 = vunpack.c.h.b16 %v261
    %v1124 = vunpack.c.l.b16 %v262
    %v1125 = vunpack.c.h.b16 %v262
    %v1126 = vunpack.c.l.b16 %v263
    %v1127 = vunpack.c.h.b16 %v263
    %v1128 = vunpack.c.l.b16 %v264
    %v1129 = vunpack.c.h.b16 %v264
    %v1130 = vunpack.c.l.b16 %v265
    %v1131 = vunpack.c.h.b16 %v265
    %v1132 = vunpack.c.l.b16 %v266
    %v1133 = vunpack.c.h.b16 %v266
    %v1134 = vunpack.c.l.b16 %v267
    %v1135 = vunpack.c.h.b16 %v267
    %v1136 = vunpack.c.l.b16 %v268
    %v1137 = vunpack.c.h.b16 %v268
    %v1138 = vunpack.c.l.b16 %v269
    %v1139 = vunpack.c.h.b16 %v269
    %v1140 = vunpack.c.l.b16 %v270
    %v1141 = vunpack.c.h.b16 %v270
    %v1142 = vunpack.c.l.b16 %v271
    %v1143 = vunpack.c.h.b16 %v271
    %v1144 = vunpack.c.l.b16 %v272
    %v1145 = vunpack.c.h.b16 %v272
    %v1146 = vunpack.c.l.b16 %v273
    %v1147 = vunpack.c.h.b16 %v273
    %v1148 = vunpack.c.l.b16 %v274
    %v1149 = vunpack.c.h.b16 %v274
    %v1150 = vunpack.c.l.b16 %v275
    %v1151 = vunpack.c.h.b16 %v275
    %v1152 = vunpack.c.l.b16 %v276
    %v1153 = vunpack.c.h.b16 %v276
    %v1154 = vunpack.c.l.b16 %v277
    %v1155 = vunpack.c.h.b16 %v277
    %v1156 = vunpack.c.l.b16 %v278
    %v1157 = vunpack.c.h.b16 %v278
    %v1158 = vunpack.c.l.b16 %v279
    %v1159 = vunpack.c.h.b16 %v279
    %v1160 = vunpack.c.l.b16 %v280
    %v1161 = vunpack.c.h.b16 %v280
    %v1162 = vunpack.c.l.b16 %v281
    %v1163 = vunpack.c.h.b16 %v281
    %v1164 = vunpack.c.l.b16 %v282
    %v1165 = vunpack.c.h.b16 %v282
    %v1166 = vunpack.c.l.b16 %v283
    %v1167 = vunpack.c.h.b16 %v283
    %v1168 = vunpack.c.l.b16 %v284
    %v1169 = vunpack.c.h.b16 %v284
    %v1170 = vunpack.c.l.b16 %v285
    %v1171 = vunpack.c.h.b16 %v285
    %v1172 = vunpack.c.l.b16 %v286
    %v1173 = vunpack.c.h.b16 %v286
    %v1174 = vunpack.c.l.b16 %v287
    %v1175 = vunpack.c.h.b16 %v287
    %v1176 = vunpack.c.l.b16 %v288
    %v1177 = vunpack.c.h.b16 %v288
    %v1178 = vunpack.c.l.b16 %v289
    %v1179 = vunpack.c.h.b16 %v289
    %v1180 = vunpack.c.l.b16 %v290
    %v1181 = vunpack.c.h.b16 %v290
    %v1182 = vunpack.c.l.b16 %v291
    %v1183 = vunpack.c.h.b16 %v291
    %v1184 = vunpack.c.l.b16 %v292
    %v1185 = vunpack.c.h.b16 %v292
    %v1186 = vunpack.c.l.b16 %v293
    %v1187 = vunpack.c.h.b16 %v293
    %v1188 = vunpack.c.l.b16 %v294
    %v1189 = vunpack.c.h.b16 %v294
    %v1190 = vunpack.c.l.b16 %v295
    %v1191 = vunpack.c.h.b16 %v295
    %v1192 = vunpack.c.l.b16 %v296
    %v1193 = vunpack.c.h.b16 %v296
    %v1194 = vunpack.c.l.b16 %v297
    %v1195 = vunpack.c.h.b16 %v297
    %v1196 = vunpack.c.l.b16 %v298
    %v1197 = vunpack.c.h.b16 %v298
    %v1198 = vunpack.c.l.b16 %v299
    %v1199 = vunpack.c.h.b16 %v299
    %v1200 = vunpack.c.l.b16 %v300
    %v1201 = vunpack.c.h.b16 %v300
    %v1202 = vunpack.c.l.b16 %v301
    %v1203 = vunpack.c.h.b16 %v301
    %v1204 = vunpack.c.l.b16 %v302
    %v1205 = vunpack.c.h.b16 %v302
    %v1206 = vunpack.c.l.b16 %v303
    %v1207 = vunpack.c.h.b16 %v303
    %v1208 = vunpack.c.l.b16 %v304
    %v1209 = vunpack.c.h.b16 %v304
    %v1210 = vunpack.c.l.b16 %v305
    %v1211 = vunpack.c.h.b16 %v305
    %v1212 = vunpack.c.l.b16 %v306
    %v1213 = vunpack.c.h.b16 %v306
    %v1214 = vunpack.c.l.b16 %v307
    %v1215 = vunpack.c.h.b16 %v307
    %v1216 = vunpack.c.l.b16 %v308
    %v1217 = vunpack.c.h.b16 %v308
    %v1218 = vunpack.c.l.b16 %v309
    %v1219 = vunpack.c.h.b16 %v309
    %v1220 = vunpack.c.l.b16 %v310
    %v1221 = vunpack.c.h.b16 %v310
    %v1222 = vunpack.c.l.b16 %v311
    %v1223 = vunpack.c.h.b16 %v311
    %v1224 = vunpack.c.l.b16 %v312
    %v1225 = vunpack.c.h.b16 %v312
    %v1226 = vunpack.c.l.b16 %v313
    %v1227 = vunpack.c.h.b16 %v313
    %v1228 = vunpack.c.l.b16 %v314
    %v1229 = vunpack.c.h.b16 %v314
    %v1230 = vunpack.c.l.b16 %v315
    %v1231 = vunpack.c.h.b16 %v315
    %v1232 = vunpack.c.l.b16 %v316
    %v1233 = vunpack.c.h.b16 %v316
    %v1234 = vunpack.c.l.b16 %v317
    %v1235 = vunpack.c.h.b16 %v317
    %v1236 = vunpack.c.l.b16 %v318
    %v1237 = vunpack.c.h.b16 %v318
    %v1238 = vunpack.c.l.b16 %v319
    %v1239 = vunpack.c.h.b16 %v319
    %v1240 = vunpack.c.l.b16 %v320
    %v1241 = vunpack.c.h.b16 %v320
    %v1242 = vunpack.c.l.b16 %v321
    %v1243 = vunpack.c.h.b16 %v321
    %v1244 = vunpack.c.l.b16 %v322
    %v1245 = vunpack.c.h.b16 %v322
    %v1246 = vunpack.c.l.b16 %v323
    %v1247 = vunpack.c.h.b16 %v323
    %v1248 = vunpack.c.l.b16 %v324
    %v1249 = vunpack.c.h.b16 %v324
    %v1250 = vunpack.c.l.b16 %v325
    %v1251 = vunpack.c.h.b16 %v325
    %v1252 = vunpack.c.l.b16 %v326
    %v1253 = vunpack.c.h.b16 %v326
    %v1254 = vunpack.c.l.b16 %v327
    %v1255 = vunpack.c.h.b16 %v327
    %v1256 = vunpack.c.l.b16 %v328
    %v1257 = vunpack.c.h.b16 %v328
    %v1258 = vunpack.c.l.b16 %v329
    %v1259 = vunpack.c.h.b16 %v329
    %v1260 = vunpack.c.l.b16 %v330
    %v1261 = vunpack.c.h.b16 %v330
    %v1262 = vunpack.c.l.b16 %v331
    %v1263 = vunpack.c.h.b16 %v331
    %v1264 = vunpack.c.l.b16 %v332
    %v1265 = vunpack.c.h.b16 %v332
    %v1266 = vunpack.c.l.b16 %v333
    %v1267 = vunpack.c.h.b16 %v333
    %v1268 = vunpack.c.l.b16 %v334
    %v1269 = vunpack.c.h.b16 %v334
    %v1270 = vunpack.c.l.b16 %v335
    %v1271 = vunpack.c.h.b16 %v335
    %v1272 = vunpack.c.l.b16 %v336
    %v1273 = vunpack.c.h.b16 %v336
    %v1274 = vunpack.c.l.b16 %v337
    %v1275 = vunpack.c.h.b16 %v337
    %v1276 = vunpack.c.l.b16 %v338
    %v1277 = vunpack.c.h.b16 %v338
    %v1278 = vunpack.c.l.b16 %v339
    %v1279 = vunpack.c.h.b16 %v339
    %v1280 = vunpack.c.l.b16 %v340
    %v1281 = vunpack.c.h.b16 %v340
    %v1282 = vunpack.c.l.b16 %v341
    %v1283 = vunpack.c.h.b16 %v341
    %v1284 = vunpack.c.l.b16 %v342
    %v1285 = vunpack.c.h.b16 %v342
    %v1286 = vunpack.c.l.b16 %v343
    %v1287 = vunpack.c.h.b16 %v343
    %v1288 = vunpack.c.l.b16 %v344
    %v1289 = vunpack.c.h.b16 %v344
    %v1290 = vunpack.c.l.b16 %v345
    %v1291 = vunpack.c.h.b16 %v345
    %v1292 = vunpack.c.l.b16 %v346
    %v1293 = vunpack.c.h.b16 %v346
    %v1294 = vunpack.c.l.b16 %v347
    %v1295 = vunpack.c.h.b16 %v347
    %v1296 = vunpack.c.l.b16 %v348
    %v1297 = vunpack.c.h.b16 %v348
    %v1298 = vunpack.c.l.b16 %v349
    %v1299 = vunpack.c.h.b16 %v349
    %v1300 = vpack.c.b16 %v730, %v724
    %v1301 = vpack.c.b16 %v731, %v725
    %v1302 = vpack.c.b16 %v732, %v726
    %v1303 = vpack.c.b16 %v733, %v727
    %v1304 = vpack.c.b16 %v734, %v728
    %v1305 = vpack.c.b16 %v735, %v729
    %v1306 = vpack.c.b16 %v742, %v736
    %v1307 = vpack.c.b16 %v743, %v737
    %v1308 = vpack.c.b16 %v744, %v738
    %v1309 = vpack.c.b16 %v745, %v739
    %v1310 = vpack.c.b16 %v746, %v740
    %v1311 = vpack.c.b16 %v747, %v741
    %v1312 = vpack.c.b16 %v754, %v748
    %v1313 = vpack.c.b16 %v755, %v749
    %v1314 = vpack.c.b16 %v756, %v750
    %v1315 = vpack.c.b16 %v757, %v751
    %v1316 = vpack.c.b16 %v758, %v752
    %v1317 = vpack.c.b16 %v759, %v753
    %v1318 = vpack.c.b16 %v766, %v760
    %v1319 = vpack.c.b16 %v767, %v761
    %v1320 = vpack.c.b16 %v768, %v762
    %v1321 = vpack.c.b16 %v769, %v763
    %v1322 = vpack.c.b16 %v770, %v764
    %v1323 = vpack.c.b16 %v771, %v765
    %v1324 = vpack.c.b16 %v778, %v772
    %v1325 = vpack.c.b16 %v779, %v773
    %v1326 = vpack.c.b16 %v780, %v774
    %v1327 = vpack.c.b16 %v781, %v775
    %v1328 = vpack.c.b16 %v782, %v776
    %v1329 = vpack.c.b16 %v783, %v777
    %v1330 = vpack.c.b16 %v790, %v784
    %v1331 = vpack.c.b16 %v791, %v785
    %v1332 = vpack.c.b16 %v792, %v786
    %v1333 = vpack.c.b16 %v793, %v787
    %v1334 = vpack.c.b16 %v794, %v788
    %v1335 = vpack.c.b16 %v795, %v789
    %v1336 = vpack.c.b16 %v802, %v796
    %v1337 = vpack.c.b16 %v803, %v797
    %v1338 = vpack.c.b16 %v804, %v798
    %v1339 = vpack.c.b16 %v805, %v799
    %v1340 = vpack.c.b16 %v806, %v800
    %v1341 = vpack.c.b16 %v807, %v801
    %v1342 = vpack.c.b16 %v814, %v808
    %v1343 = vpack.c.b16 %v815, %v809
    %v1344 = vpack.c.b16 %v816, %v810
    %v1345 = vpack.c.b16 %v817, %v811
    %v1346 = vpack.c.b16 %v818, %v812
    %v1347 = vpack.c.b16 %v819, %v813
    %v1348 = vpack.c.b16 %v826, %v820
    %v1349 = vpack.c.b16 %v827, %v821
    %v1350 = vpack.c.b16 %v828, %v822
    %v1351 = vpack.c.b16 %v829, %v823
    %v1352 = vpack.c.b16 %v830, %v824
    %v1353 = vpack.c.b16 %v831, %v825
    %v1354 = vpack.c.b16 %v838, %v832
    %v1355 = vpack.c.b16 %v839, %v833
    %v1356 = vpack.c.b16 %v840, %v834
    %v1357 = vpack.c.b16 %v841, %v835
    %v1358 = vpack.c.b16 %v842, %v836
    %v1359 = vpack.c.b16 %v843, %v837
    %v1360 = vpack.c.b16 %v850, %v844
    %v1361 = vpack.c.b16 %v851, %v845
    %v1362 = vpack.c.b16 %v852, %v846
    %v1363 = vpack.c.b16 %v853, %v847
    %v1364 = vpack.c.b16 %v854, %v848
    %v1365 = vpack.c.b16 %v855, %v849
    %v1366 = vpack.c.b16 %v862, %v856
    %v1367 = vpack.c.b16 %v863, %v857
    %v1368 = vpack.c.b16 %v864, %v858
    %v1369 = vpack.c.b16 %v865, %v859
    %v1370 = vpack.c.b16 %v866, %v860
    %v1371 = vpack.c.b16 %v867, %v861
    %v1372 = vpack.c.b16 %v874, %v868
    %v1373 = vpack.c.b16 %v875, %v869
    %v1374 = vpack.c.b16 %v876, %v870
    %v1375 = vpack.c.b16 %v877, %v871
    %v1376 = vpack.c.b16 %v878, %v872
    %v1377 = vpack.c.b16 %v879, %v873
    %v1378 = vpack.c.b16 %v886, %v880
    %v1379 = vpack.c.b16 %v887, %v881
    %v1380 = vpack.c.b16 %v888, %v882
    %v1381 = vpack.c.b16 %v889, %v883
    %v1382 = vpack.c.b16 %v890, %v884
    %v1383 = vpack.c.b16 %v891, %v885
    %v1384 = vpack.c.b16 %v898, %v892
    %v1385 = vpack.c.b16 %v899, %v893
    %v1386 = vpack.c.b16 %v900, %v894
    %v1387 = vpack.c.b16 %v901, %v895
    %v1388 = vpack.c.b16 %v902, %v896
    %v1389 = vpack.c.b16 %v903, %v897
    %v1390 = vpack.c.b16 %v910, %v904
    %v1391 = vpack.c.b16 %v911, %v905
    %v1392 = vpack.c.b16 %v912, %v906
    %v1393 = vpack.c.b16 %v913, %v907
    %v1394 = vpack.c.b16 %v914, %v908
    %v1395 = vpack.c.b16 %v915, %v909
    %v1396 = vpack.c.b16 %v922, %v916
    %v1397 = vpack.c.b16 %v923, %v917
    %v1398 = vpack.c.b16 %v924, %v918
    %v1399 = vpack.c.b16 %v925, %v919
    %v1400 = vpack.c.b16 %v926, %v920
    %v1401 = vpack.c.b16 %v927, %v921
    %v1402 = vpack.c.b16 %v934, %v928
    %v1403 = vpack.c.b16 %v935, %v929
    %v1404 = vpack.c.b16 %v936, %v930
    %v1405 = vpack.c.b16 %v937, %v931
    %v1406 = vpack.c.b16 %v938, %v932
    %v1407 = vpack.c.b16 %v939, %v933
    %v1408 = vpack.c.b16 %v946, %v940
    %v1409 = vpack.c.b16 %v947, %v941
    %v1410 = vpack.c.b16 %v948, %v942
    %v1411 = vpack.c.b16 %v949, %v943
    %v1412 = vpack.c.b16 %v950, %v944
    %v1413 = vpack.c.b16 %v951, %v945
    %v1414 = vpack.c.b16 %v958, %v952
    %v1415 = vpack.c.b16 %v959, %v953
    %v1416 = vpack.c.b16 %v960, %v954
    %v1417 = vpack.c.b16 %v961, %v955
    %v1418 = vpack.c.b16 %v962, %v956
    %v1419 = vpack.c.b16 %v963, %v957
    %v1420 = vpack.c.b16 %v970, %v964
    %v1421 = vpack.c.b16 %v971, %v965
    %v1422 = vpack.c.b16 %v972, %v966
    %v1423 = vpack.c.b16 %v973, %v967
    %v1424 = vpack.c.b16 %v974, %v968
    %v1425 = vpack.c.b16 %v975, %v969
    %v1426 = vpack.c.b16 %v982, %v976
    %v1427 = vpack.c.b16 %v983, %v977
    %v1428 = vpack.c.b16 %v984, %v978
    %v1429 = vpack.c.b16 %v985, %v979
    %v1430 = vpack.c.b16 %v986, %v980
    %v1431 = vpack.c.b16 %v987, %v981
    %v1432 = vpack.c.b16 %v994, %v988
    %v1433 = vpack.c.b16 %v995, %v989
    %v1434 = vpack.c.b16 %v996, %v990
    %v1435 = vpack.c.b16 %v997, %v991
    %v1436 = vpack.c.b16 %v998, %v992
    %v1437 = vpack.c.b16 %v999, %v993
    %v1438 = vpack.c.b16 %v1006, %v1000
    %v1439 = vpack.c.b16 %v1007, %v1001
    %v1440 = vpack.c.b16 %v1008, %v1002
    %v1441 = vpack.c.b16 %v1009, %v1003
    %v1442 = vpack.c.b16 %v1010, %v1004
    %v1443 = vpack.c.b16 %v1011, %v1005
    %v1444 = vpack.c.b16 %v1018, %v1012
    %v1445 = vpack.c.b16 %v1019, %v1013
    %v1446 = vpack.c.b16 %v1020, %v1014
    %v1447 = vpack.c.b16 %v1021, %v1015
    %v1448 = vpack.c.b16 %v1022, %v1016
    %v1449 = vpack.c.b16 %v1023, %v1017
    %v1450 = vpack.c.b16 %v1030, %v1024
    %v1451 = vpack.c.b16 %v1031, %v1025
    %v1452 = vpack.c.b16 %v1032, %v1026
    %v1453 = vpack.c.b16 %v1033, %v1027
    %v1454 = vpack.c.b16 %v1034, %v1028
    %v1455 = vpack.c.b16 %v1035, %v1029
    %v1456 = vpack.c.b16 %v1042, %v1036
    %v1457 = vpack.c.b16 %v1043, %v1037
    %v1458 = vpack.c.b16 %v1044, %v1038
    %v1459 = vpack.c.b16 %v1045, %v1039
    %v1460 = vpack.c.b16 %v1046, %v1040
    %v1461 = vpack.c.b16 %v1047, %v1041
    %v1462 = vpack.c.b16 %v1054, %v1048
    %v1463 = vpack.c.b16 %v1055, %v1049
    %v1464 = vpack.c.b16 %v1056, %v1050
    %v1465 = vpack.c.b16 %v1057, %v1051
    %v1466 = vpack.c.b16 %v1058, %v1052
    %v1467 = vpack.c.b16 %v1059, %v1053
    %v1468 = vpack.c.b16 %v1066, %v1060
    %v1469 = vpack.c.b16 %v1067, %v1061
    %v1470 = vpack.c.b16 %v1068, %v1062
    %v1471 = vpack.c.b16 %v1069, %v1063
    %v1472 = vpack.c.b16 %v1070, %v1064
    %v1473 = vpack.c.b16 %v1071, %v1065
    %v1474 = vpack.c.b16 %v1078, %v1072
    %v1475 = vpack.c.b16 %v1079, %v1073
    %v1476 = vpack.c.b16 %v1080, %v1074
    %v1477 = vpack.c.b16 %v1081, %v1075
    %v1478 = vpack.c.b16 %v1082, %v1076
    %v1479 = vpack.c.b16 %v1083, %v1077
    %v1480 = vpack.c.b16 %v1090, %v1084
    %v1481 = vpack.c.b16 %v1091, %v1085
    %v1482 = vpack.c.b16 %v1092, %v1086
    %v1483 = vpack.c.b16 %v1093, %v1087
    %v1484 = vpack.c.b16 %v1094, %v1088
    %v1485 = vpack.c.b16 %v1095, %v1089
    %v1486 = vpack.c.b16 %v1102, %v1096
    %v1487 = vpack.c.b16 %v1103, %v1097
    %v1488 = vpack.c.b16 %v1104, %v1098
    %v1489 = vpack.c.b16 %v1105, %v1099
    %v1490 = vpack.c.b16 %v1106, %v1100
    %v1491 = vpack.c.b16 %v1107, %v1101
    %v1492 = vpack.c.b16 %v1114, %v1108
    %v1493 = vpack.c.b16 %v1115, %v1109
    %v1494 = vpack.c.b16 %v1116, %v1110
    %v1495 = vpack.c.b16 %v1117, %v1111
    %v1496 = vpack.c.b16 %v1118, %v1112
    %v1497 = vpack.c.b16 %v1119, %v1113
    %v1498 = vpack.c.b16 %v1126, %v1120
    %v1499 = vpack.c.b16 %v1127, %v1121
    %v1500 = vpack.c.b16 %v1128, %v1122
    %v1501 = vpack.c.b16 %v1129, %v1123
    %v1502 = vpack.c.b16 %v1130, %v1124
    %v1503 = vpack.c.b16 %v1131, %v1125
    %v1504 = vpack.c.b16 %v1138, %v1132
    %v1505 = vpack.c.b16 %v1139, %v1133
    %v1506 = vpack.c.b16 %v1140, %v1134
    %v1507 = vpack.c.b16 %v1141, %v1135
    %v1508 = vpack.c.b16 %v1142, %v1136
    %v1509 = vpack.c.b16 %v1143, %v1137
    %v1510 = vpack.c.b16 %v1150, %v1144
    %v1511 = vpack.c.b16 %v1151, %v1145
    %v1512 = vpack.c.b16 %v1152, %v1146
    %v1513 = vpack.c.b16 %v1153, %v1147
    %v1514 = vpack.c.b16 %v1154, %v1148
    %v1515 = vpack.c.b16 %v1155, %v1149
    %v1516 = vpack.c.b16 %v1162, %v1156
    %v1517 = vpack.c.b16 %v1163, %v1157
    %v1518 = vpack.c.b16 %v1164, %v1158
    %v1519 = vpack.c.b16 %v1165, %v1159
    %v1520 = vpack.c.b16 %v1166, %v1160
    %v1521 = vpack.c.b16 %v1167, %v1161
    %v1522 = vpack.c.b16 %v1174, %v1168
    %v1523 = vpack.c.b16 %v1175, %v1169
    %v1524 = vpack.c.b16 %v1176, %v1170
    %v1525 = vpack.c.b16 %v1177, %v1171
    %v1526 = vpack.c.b16 %v1178, %v1172
    %v1527 = vpack.c.b16 %v1179, %v1173
    %v1528 = vpack.c.b16 %v1186, %v1180
    %v1529 = vpack.c.b16 %v1187, %v1181
    %v1530 = vpack.c.b16 %v1188, %v1182
    %v1531 = vpack.c.b16 %v1189, %v1183
    %v1532 = vpack.c.b16 %v1190, %v1184
    %v1533 = vpack.c.b16 %v1191, %v1185
    %v1534 = vpack.c.b16 %v1198, %v1192
    %v1535 = vpack.c.b16 %v1199, %v1193
    %v1536 = vpack.c.b16 %v1200, %v1194
    %v1537 = vpack.c.b16 %v1201, %v1195
    %v1538 = vpack.c.b16 %v1202, %v1196
    %v1539 = vpack.c.b16 %v1203, %v1197
    %v1540 = vpack.c.b16 %v1210, %v1204
    %v1541 = vpack.c.b16 %v1211, %v1205
    %v1542 = vpack.c.b16 %v1212, %v1206
    %v1543 = vpack.c.b16 %v1213, %v1207
    %v1544 = vpack.c.b16 %v1214, %v1208
    %v1545 = vpack.c.b16 %v1215, %v1209
    %v1546 = vpack.c.b16 %v1222, %v1216
    %v1547 = vpack.c.b16 %v1223, %v1217
    %v1548 = vpack.c.b16 %v1224, %v1218
    %v1549 = vpack.c.b16 %v1225, %v1219
    %v1550 = vpack.c.b16 %v1226, %v1220
    %v1551 = vpack.c.b16 %v1227, %v1221
    %v1552 = vpack.c.b16 %v1234, %v1228
    %v1553 = vpack.c.b16 %v1235, %v1229
    %v1554 = vpack.c.b16 %v1236, %v1230
    %v1555 = vpack.c.b16 %v1237, %v1231
    %v1556 = vpack.c.b16 %v1238, %v1232
    %v1557 = vpack.c.b16 %v1239, %v1233
    %v1558 = vpack.c.b16 %v1246, %v1240
    %v1559 = vpack.c.b16 %v1247, %v1241
    %v1560 = vpack.c.b16 %v1248, %v1242
    %v1561 = vpack.c.b16 %v1249, %v1243
    %v1562 = vpack.c.b16 %v1250, %v1244
    %v1563 = vpack.c.b16 %v1251, %v1245
    %v1564 = vpack.c.b16 %v1258, %v1252
    %v1565 = vpack.c.b16 %v1259, %v1253
    %v1566 = vpack.c.b16 %v1260, %v1254
    %v1567 = vpack.c.b16 %v1261, %v1255
    %v1568 = vpack.c.b16 %v1262, %v1256
    %v1569 = vpack.c.b16 %v1263, %v1257
    %v1570 = vpack.c.b16 %v1270, %v1264
    %v1571 = vpack.c.b16 %v1271, %v1265
    %v1572 = vpack.c.b16 %v1272, %v1266
    %v1573 = vpack.c.b16 %v1273, %v1267
    %v1574 = vpack.c.b16 %v1274, %v1268
    %v1575 = vpack.c.b16 %v1275, %v1269
    %v1576 = vpack.c.b16 %v1282, %v1276
    %v1577 = vpack.c.b16 %v1283, %v1277
    %v1578 = vpack.c.b16 %v1284, %v1278
    %v1579 = vpack.c.b16 %v1285, %v1279
    %v1580 = vpack.c.b16 %v1286, %v1280
    %v1581 = vpack.c.b16 %v1287, %v1281
    %v1582 = vpack.c.b16 %v1294, %v1288
    %v1583 = vpack.c.b16 %v1295, %v1289
    %v1584 = vpack.c.b16 %v1296, %v1290
    %v1585 = vpack.c.b16 %v1297, %v1291
    %v1586 = vpack.c.b16 %v1298, %v1292
    %v1587 = vpack.c.b16 %v1299, %v1293
    %1876 = vmatprep.subr.bf16.mxu0 %v1301
    %1877 = vmatpush1.bf16.msra.mxu0 %v1300
    %1878 = vmatprep.subr.bf16.mxu0 %v1307
    %1879 = vmatpush1.bf16.msra.mxu0 %v1306
    %1880 = vmatprep.subr.bf16.mxu0 %v1313
    %1881 = vmatpush1.bf16.msra.mxu0 %v1312
    %1882 = vmatprep.subr.bf16.mxu0 %v1319
    %1883 = vmatpush1.bf16.msra.mxu0 %v1318
    %1884 = vmatprep.subr.bf16.mxu0 %v1325
    %1885 = vmatpush1.bf16.msra.mxu0 %v1324
    %1886 = vmatprep.subr.bf16.mxu0 %v1331
    %1887 = vmatpush1.bf16.msra.mxu0 %v1330
    %1888 = vmatprep.subr.bf16.mxu0 %v1337
    %1889 = vmatpush1.bf16.msra.mxu0 %v1336
    %1890 = vmatprep.subr.bf16.mxu0 %v1343
    %1891 = vmatpush1.bf16.msra.mxu0 %v1342
    %1892 = vmatprep.subr.bf16.mxu0 %v1349
    %1893 = vmatpush1.bf16.msra.mxu0 %v1348
    %1894 = vmatprep.subr.bf16.mxu0 %v1355
    %1895 = vmatpush1.bf16.msra.mxu0 %v1354
    %1896 = vmatprep.subr.bf16.mxu0 %v1361
    %1897 = vmatpush1.bf16.msra.mxu0 %v1360
    %1898 = vmatprep.subr.bf16.mxu0 %v1367
    %1899 = vmatpush1.bf16.msra.mxu0 %v1366
    %1900 = vmatprep.subr.bf16.mxu0 %v1373
    %1901 = vmatpush1.bf16.msra.mxu0 %v1372
    %1902 = vmatprep.subr.bf16.mxu0 %v1379
    %1903 = vmatpush1.bf16.msra.mxu0 %v1378
    %1904 = vmatprep.subr.bf16.mxu0 %v1385
    %1905 = vmatpush1.bf16.msra.mxu0 %v1384
    %1906 = vmatprep.subr.bf16.mxu0 %v1391
    %1907 = vmatpush1.bf16.msra.mxu0 %v1390
    %1908 = vmatprep.mubr.bf16.mxu0 %v425
    %1909 = vmatmul.mubr.bf16.gmra.mrb[0].mxu0 %v424
    %v1910 = vpop.f32.mrb[0].mxu0
    %v1911 = vadd.f32 %v385, %v1910
    %v1912 = vpop.f32.mrb[0].mxu0
    %v1913 = vadd.f32 %v389, %v1912
    %v1914 = vpop.f32.mrb[0].mxu0
    %v1915 = vadd.f32 %v385, %v1914
    %v1916 = vpop.f32.mrb[0].mxu0
    %v1917 = vadd.f32 %v389, %v1916
    %1918 = vdwg.mxu0
    %1919 = vmatprep.subr.bf16.mxu0 %v1397
    %1920 = vmatpush1.bf16.msra.mxu0 %v1396
    %1921 = vmatprep.subr.bf16.mxu0 %v1403
    %1922 = vmatpush1.bf16.msra.mxu0 %v1402
    %1923 = vmatprep.subr.bf16.mxu0 %v1409
    %1924 = vmatpush1.bf16.msra.mxu0 %v1408
    %1925 = vmatprep.subr.bf16.mxu0 %v1415
    %1926 = vmatpush1.bf16.msra.mxu0 %v1414
    %1927 = vmatprep.subr.bf16.mxu0 %v1421
    %1928 = vmatpush1.bf16.msra.mxu0 %v1420
    %1929 = vmatprep.subr.bf16.mxu0 %v1427
    %1930 = vmatpush1.bf16.msra.mxu0 %v1426
    %1931 = vmatprep.subr.bf16.mxu0 %v1433
    %1932 = vmatpush1.bf16.msra.mxu0 %v1432
    %1933 = vmatprep.subr.bf16.mxu0 %v1439
    %1934 = vmatpush1.bf16.msra.mxu0 %v1438
    %1935 = vmatprep.subr.bf16.mxu0 %v1445
    %1936 = vmatpush1.bf16.msra.mxu0 %v1444
    %1937 = vmatprep.subr.bf16.mxu0 %v1451
    %1938 = vmatpush1.bf16.msra.mxu0 %v1450
    %1939 = vmatprep.subr.bf16.mxu0 %v1457
    %1940 = vmatpush1.bf16.msra.mxu0 %v1456
    %1941 = vmatprep.subr.bf16.mxu0 %v1463
    %1942 = vmatpush1.bf16.msra.mxu0 %v1462
    %1943 = vmatprep.subr.bf16.mxu0 %v1469
    %1944 = vmatpush1.bf16.msra.mxu0 %v1468
    %1945 = vmatprep.subr.bf16.mxu0 %v1475
    %1946 = vmatpush1.bf16.msra.mxu0 %v1474
    %1947 = vmatprep.subr.bf16.mxu0 %v1481
    %1948 = vmatpush1.bf16.msra.mxu0 %v1480
    %1949 = vmatprep.subr.bf16.mxu0 %v1487
    %1950 = vmatpush1.bf16.msra.mxu0 %v1486
    %1951 = vmatprep.mubr.bf16.mxu0 %v427
    %1952 = vmatmul.mubr.bf16.gmra.mrb[0].mxu0 %v426
    %v1953 = vpop.f32.mrb[0].mxu0
    %v1954 = vadd.f32 %v1911, %v1953
    %v1955 = vpop.f32.mrb[0].mxu0
    %v1956 = vadd.f32 %v1913, %v1955
    %v1957 = vpop.f32.mrb[0].mxu0
    %v1958 = vadd.f32 %v1915, %v1957
    %v1959 = vpop.f32.mrb[0].mxu0
    %v1960 = vadd.f32 %v1917, %v1959
    %1961 = vdwg.mxu0
    %1962 = vmatprep.subr.bf16.mxu0 %v1493
    %1963 = vmatpush1.bf16.msra.mxu0 %v1492
    %1964 = vmatprep.subr.bf16.mxu0 %v1499
    %1965 = vmatpush1.bf16.msra.mxu0 %v1498
    %1966 = vmatprep.subr.bf16.mxu0 %v1505
    %1967 = vmatpush1.bf16.msra.mxu0 %v1504
    %1968 = vmatprep.subr.bf16.mxu0 %v1511
    %1969 = vmatpush1.bf16.msra.mxu0 %v1510
    %1970 = vmatprep.subr.bf16.mxu0 %v1517
    %1971 = vmatpush1.bf16.msra.mxu0 %v1516
    %1972 = vmatprep.subr.bf16.mxu0 %v1523
    %1973 = vmatpush1.bf16.msra.mxu0 %v1522
    %1974 = vmatprep.subr.bf16.mxu0 %v1529
    %1975 = vmatpush1.bf16.msra.mxu0 %v1528
    %1976 = vmatprep.subr.bf16.mxu0 %v1535
    %1977 = vmatpush1.bf16.msra.mxu0 %v1534
    %1978 = vmatprep.subr.bf16.mxu0 %v1541
    %1979 = vmatpush1.bf16.msra.mxu0 %v1540
    %1980 = vmatprep.subr.bf16.mxu0 %v1547
    %1981 = vmatpush1.bf16.msra.mxu0 %v1546
    %1982 = vmatprep.subr.bf16.mxu0 %v1553
    %1983 = vmatpush1.bf16.msra.mxu0 %v1552
    %1984 = vmatprep.subr.bf16.mxu0 %v1559
    %1985 = vmatpush1.bf16.msra.mxu0 %v1558
    %1986 = vmatprep.subr.bf16.mxu0 %v1565
    %1987 = vmatpush1.bf16.msra.mxu0 %v1564
    %1988 = vmatprep.subr.bf16.mxu0 %v1571
    %1989 = vmatpush1.bf16.msra.mxu0 %v1570
    %1990 = vmatprep.subr.bf16.mxu0 %v1577
    %1991 = vmatpush1.bf16.msra.mxu0 %v1576
    %1992 = vmatprep.subr.bf16.mxu0 %v1583
    %1993 = vmatpush1.bf16.msra.mxu0 %v1582
    %1994 = vmatprep.mubr.bf16.mxu0 %v429
    %1995 = vmatmul.mubr.bf16.gmra.mrb[0].mxu0 %v428
    %v1996 = vpop.f32.mrb[0].mxu0
    %v1997 = vadd.f32 %v1954, %v1996
    %v1998 = vpop.f32.mrb[0].mxu0
    %v1999 = vadd.f32 %v1956, %v1998
    %v2000 = vpop.f32.mrb[0].mxu0
    %v2001 = vadd.f32 %v1958, %v2000
    %v2002 = vpop.f32.mrb[0].mxu0
    %v2003 = vadd.f32 %v1960, %v2002
    %2004 = vdwg.mxu0
    %2005 = vmatprep.subr.bf16.mxu0 %v1303
    %2006 = vmatpush1.bf16.msra.mxu0 %v1302
    %2007 = vmatprep.subr.bf16.mxu0 %v1309
    %2008 = vmatpush1.bf16.msra.mxu0 %v1308
    %2009 = vmatprep.subr.bf16.mxu0 %v1315
    %2010 = vmatpush1.bf16.msra.mxu0 %v1314
    %2011 = vmatprep.subr.bf16.mxu0 %v1321
    %2012 = vmatpush1.bf16.msra.mxu0 %v1320
    %2013 = vmatprep.subr.bf16.mxu0 %v1327
    %2014 = vmatpush1.bf16.msra.mxu0 %v1326
    %2015 = vmatprep.subr.bf16.mxu0 %v1333
    %2016 = vmatpush1.bf16.msra.mxu0 %v1332
    %2017 = vmatprep.subr.bf16.mxu0 %v1339
    %2018 = vmatpush1.bf16.msra.mxu0 %v1338
    %2019 = vmatprep.subr.bf16.mxu0 %v1345
    %2020 = vmatpush1.bf16.msra.mxu0 %v1344
    %2021 = vmatprep.subr.bf16.mxu0 %v1351
    %2022 = vmatpush1.bf16.msra.mxu0 %v1350
    %2023 = vmatprep.subr.bf16.mxu0 %v1357
    %2024 = vmatpush1.bf16.msra.mxu0 %v1356
    %2025 = vmatprep.subr.bf16.mxu0 %v1363
    %2026 = vmatpush1.bf16.msra.mxu0 %v1362
    %2027 = vmatprep.subr.bf16.mxu0 %v1369
    %2028 = vmatpush1.bf16.msra.mxu0 %v1368
    %2029 = vmatprep.subr.bf16.mxu0 %v1375
    %2030 = vmatpush1.bf16.msra.mxu0 %v1374
    %2031 = vmatprep.subr.bf16.mxu0 %v1381
    %2032 = vmatpush1.bf16.msra.mxu0 %v1380
    %2033 = vmatprep.subr.bf16.mxu0 %v1387
    %2034 = vmatpush1.bf16.msra.mxu0 %v1386
    %2035 = vmatprep.subr.bf16.mxu0 %v1393
    %2036 = vmatpush1.bf16.msra.mxu0 %v1392
    %2037 = vmatprep.mubr.bf16.mxu0 %v425
    %2038 = vmatmul.mubr.bf16.gmra.mrb[0].mxu0 %v424
    %v2039 = vpop.f32.mrb[0].mxu0
    %v2040 = vadd.f32 %v393, %v2039
    %v2041 = vpop.f32.mrb[0].mxu0
    %v2042 = vadd.f32 %v397, %v2041
    %v2043 = vpop.f32.mrb[0].mxu0
    %v2044 = vadd.f32 %v393, %v2043
    %v2045 = vpop.f32.mrb[0].mxu0
    %v2046 = vadd.f32 %v397, %v2045
    %2047 = vdwg.mxu0
    %2048 = vmatprep.subr.bf16.mxu0 %v1399
    %2049 = vmatpush1.bf16.msra.mxu0 %v1398
    %2050 = vmatprep.subr.bf16.mxu0 %v1405
    %2051 = vmatpush1.bf16.msra.mxu0 %v1404
    %2052 = vmatprep.subr.bf16.mxu0 %v1411
    %2053 = vmatpush1.bf16.msra.mxu0 %v1410
    %2054 = vmatprep.subr.bf16.mxu0 %v1417
    %2055 = vmatpush1.bf16.msra.mxu0 %v1416
    %2056 = vmatprep.subr.bf16.mxu0 %v1423
    %2057 = vmatpush1.bf16.msra.mxu0 %v1422
    %2058 = vmatprep.subr.bf16.mxu0 %v1429
    %2059 = vmatpush1.bf16.msra.mxu0 %v1428
    %2060 = vmatprep.subr.bf16.mxu0 %v1435
    %2061 = vmatpush1.bf16.msra.mxu0 %v1434
    %2062 = vmatprep.subr.bf16.mxu0 %v1441
    %2063 = vmatpush1.bf16.msra.mxu0 %v1440
    %2064 = vmatprep.subr.bf16.mxu0 %v1447
    %2065 = vmatpush1.bf16.msra.mxu0 %v1446
    %2066 = vmatprep.subr.bf16.mxu0 %v1453
    %2067 = vmatpush1.bf16.msra.mxu0 %v1452
    %2068 = vmatprep.subr.bf16.mxu0 %v1459
    %2069 = vmatpush1.bf16.msra.mxu0 %v1458
    %2070 = vmatprep.subr.bf16.mxu0 %v1465
    %2071 = vmatpush1.bf16.msra.mxu0 %v1464
    %2072 = vmatprep.subr.bf16.mxu0 %v1471
    %2073 = vmatpush1.bf16.msra.mxu0 %v1470
    %2074 = vmatprep.subr.bf16.mxu0 %v1477
    %2075 = vmatpush1.bf16.msra.mxu0 %v1476
    %2076 = vmatprep.subr.bf16.mxu0 %v1483
    %2077 = vmatpush1.bf16.msra.mxu0 %v1482
    %2078 = vmatprep.subr.bf16.mxu0 %v1489
    %2079 = vmatpush1.bf16.msra.mxu0 %v1488
    %2080 = vmatprep.mubr.bf16.mxu0 %v427
    %2081 = vmatmul.mubr.bf16.gmra.mrb[0].mxu0 %v426
    %v2082 = vpop.f32.mrb[0].mxu0
    %v2083 = vadd.f32 %v2040, %v2082
    %v2084 = vpop.f32.mrb[0].mxu0
    %v2085 = vadd.f32 %v2042, %v2084
    %v2086 = vpop.f32.mrb[0].mxu0
    %v2087 = vadd.f32 %v2044, %v2086
    %v2088 = vpop.f32.mrb[0].mxu0
    %v2089 = vadd.f32 %v2046, %v2088
    %2090 = vdwg.mxu0
    %2091 = vmatprep.subr.bf16.mxu0 %v1495
    %2092 = vmatpush1.bf16.msra.mxu0 %v1494
    %2093 = vmatprep.subr.bf16.mxu0 %v1501
    %2094 = vmatpush1.bf16.msra.mxu0 %v1500
    %2095 = vmatprep.subr.bf16.mxu0 %v1507
    %2096 = vmatpush1.bf16.msra.mxu0 %v1506
    %2097 = vmatprep.subr.bf16.mxu0 %v1513
    %2098 = vmatpush1.bf16.msra.mxu0 %v1512
    %2099 = vmatprep.subr.bf16.mxu0 %v1519
    %2100 = vmatpush1.bf16.msra.mxu0 %v1518
    %2101 = vmatprep.subr.bf16.mxu0 %v1525
    %2102 = vmatpush1.bf16.msra.mxu0 %v1524
    %2103 = vmatprep.subr.bf16.mxu0 %v1531
    %2104 = vmatpush1.bf16.msra.mxu0 %v1530
    %2105 = vmatprep.subr.bf16.mxu0 %v1537
    %2106 = vmatpush1.bf16.msra.mxu0 %v1536
    %2107 = vmatprep.subr.bf16.mxu0 %v1543
    %2108 = vmatpush1.bf16.msra.mxu0 %v1542
    %2109 = vmatprep.subr.bf16.mxu0 %v1549
    %2110 = vmatpush1.bf16.msra.mxu0 %v1548
    %2111 = vmatprep.subr.bf16.mxu0 %v1555
    %2112 = vmatpush1.bf16.msra.mxu0 %v1554
    %2113 = vmatprep.subr.bf16.mxu0 %v1561
    %2114 = vmatpush1.bf16.msra.mxu0 %v1560
    %2115 = vmatprep.subr.bf16.mxu0 %v1567
    %2116 = vmatpush1.bf16.msra.mxu0 %v1566
    %2117 = vmatprep.subr.bf16.mxu0 %v1573
    %2118 = vmatpush1.bf16.msra.mxu0 %v1572
    %2119 = vmatprep.subr.bf16.mxu0 %v1579
    %2120 = vmatpush1.bf16.msra.mxu0 %v1578
    %2121 = vmatprep.subr.bf16.mxu0 %v1585
    %2122 = vmatpush1.bf16.msra.mxu0 %v1584
    %2123 = vmatprep.mubr.bf16.mxu0 %v429
    %2124 = vmatmul.mubr.bf16.gmra.mrb[0].mxu0 %v428
    %v2125 = vpop.f32.mrb[0].mxu0
    %v2126 = vadd.f32 %v2083, %v2125
    %v2127 = vpop.f32.mrb[0].mxu0
    %v2128 = vadd.f32 %v2085, %v2127
    %v2129 = vpop.f32.mrb[0].mxu0
    %v2130 = vadd.f32 %v2087, %v2129
    %v2131 = vpop.f32.mrb[0].mxu0
    %v2132 = vadd.f32 %v2089, %v2131
    %2133 = vdwg.mxu0
    %2134 = vmatprep.subr.bf16.mxu0 %v1305
    %2135 = vmatpush1.bf16.msra.mxu0 %v1304
    %2136 = vmatprep.subr.bf16.mxu0 %v1311
    %2137 = vmatpush1.bf16.msra.mxu0 %v1310
    %2138 = vmatprep.subr.bf16.mxu0 %v1317
    %2139 = vmatpush1.bf16.msra.mxu0 %v1316
    %2140 = vmatprep.subr.bf16.mxu0 %v1323
    %2141 = vmatpush1.bf16.msra.mxu0 %v1322
    %2142 = vmatprep.subr.bf16.mxu0 %v1329
    %2143 = vmatpush1.bf16.msra.mxu0 %v1328
    %2144 = vmatprep.subr.bf16.mxu0 %v1335
    %2145 = vmatpush1.bf16.msra.mxu0 %v1334
    %2146 = vmatprep.subr.bf16.mxu0 %v1341
    %2147 = vmatpush1.bf16.msra.mxu0 %v1340
    %2148 = vmatprep.subr.bf16.mxu0 %v1347
    %2149 = vmatpush1.bf16.msra.mxu0 %v1346
    %2150 = vmatprep.subr.bf16.mxu0 %v1353
    %2151 = vmatpush1.bf16.msra.mxu0 %v1352
    %2152 = vmatprep.subr.bf16.mxu0 %v1359
    %2153 = vmatpush1.bf16.msra.mxu0 %v1358
    %2154 = vmatprep.subr.bf16.mxu0 %v1365
    %2155 = vmatpush1.bf16.msra.mxu0 %v1364
    %2156 = vmatprep.subr.bf16.mxu0 %v1371
    %2157 = vmatpush1.bf16.msra.mxu0 %v1370
    %2158 = vmatprep.subr.bf16.mxu0 %v1377
    %2159 = vmatpush1.bf16.msra.mxu0 %v1376
    %2160 = vmatprep.subr.bf16.mxu0 %v1383
    %2161 = vmatpush1.bf16.msra.mxu0 %v1382
    %2162 = vmatprep.subr.bf16.mxu0 %v1389
    %2163 = vmatpush1.bf16.msra.mxu0 %v1388
    %2164 = vmatprep.subr.bf16.mxu0 %v1395
    %2165 = vmatpush1.bf16.msra.mxu0 %v1394
    %2166 = vmatprep.mubr.bf16.mxu0 %v425
    %2167 = vmatmul.mubr.bf16.gmra.mrb[0].mxu0 %v424
    %v2168 = vpop.f32.mrb[0].mxu0
    %v2169 = vadd.f32 %v401, %v2168
    %v2170 = vpop.f32.mrb[0].mxu0
    %v2171 = vadd.f32 %v405, %v2170
    %v2172 = vpop.f32.mrb[0].mxu0
    %v2173 = vadd.f32 %v401, %v2172
    %v2174 = vpop.f32.mrb[0].mxu0
    %v2175 = vadd.f32 %v405, %v2174
    %2176 = vdwg.mxu0
    %2177 = vmatprep.subr.bf16.mxu0 %v1401
    %2178 = vmatpush1.bf16.msra.mxu0 %v1400
    %2179 = vmatprep.subr.bf16.mxu0 %v1407
    %2180 = vmatpush1.bf16.msra.mxu0 %v1406
    %2181 = vmatprep.subr.bf16.mxu0 %v1413
    %2182 = vmatpush1.bf16.msra.mxu0 %v1412
    %2183 = vmatprep.subr.bf16.mxu0 %v1419
    %2184 = vmatpush1.bf16.msra.mxu0 %v1418
    %2185 = vmatprep.subr.bf16.mxu0 %v1425
    %2186 = vmatpush1.bf16.msra.mxu0 %v1424
    %2187 = vmatprep.subr.bf16.mxu0 %v1431
    %2188 = vmatpush1.bf16.msra.mxu0 %v1430
    %2189 = vmatprep.subr.bf16.mxu0 %v1437
    %2190 = vmatpush1.bf16.msra.mxu0 %v1436
    %2191 = vmatprep.subr.bf16.mxu0 %v1443
    %2192 = vmatpush1.bf16.msra.mxu0 %v1442
    %2193 = vmatprep.subr.bf16.mxu0 %v1449
    %2194 = vmatpush1.bf16.msra.mxu0 %v1448
    %2195 = vmatprep.subr.bf16.mxu0 %v1455
    %2196 = vmatpush1.bf16.msra.mxu0 %v1454
    %2197 = vmatprep.subr.bf16.mxu0 %v1461
    %2198 = vmatpush1.bf16.msra.mxu0 %v1460
    %2199 = vmatprep.subr.bf16.mxu0 %v1467
    %2200 = vmatpush1.bf16.msra.mxu0 %v1466
    %2201 = vmatprep.subr.bf16.mxu0 %v1473
    %2202 = vmatpush1.bf16.msra.mxu0 %v1472
    %2203 = vmatprep.subr.bf16.mxu0 %v1479
    %2204 = vmatpush1.bf16.msra.mxu0 %v1478
    %2205 = vmatprep.subr.bf16.mxu0 %v1485
    %2206 = vmatpush1.bf16.msra.mxu0 %v1484
    %2207 = vmatprep.subr.bf16.mxu0 %v1491
    %2208 = vmatpush1.bf16.msra.mxu0 %v1490
    %2209 = vmatprep.mubr.bf16.mxu0 %v427
    %2210 = vmatmul.mubr.bf16.gmra.mrb[0].mxu0 %v426
    %v2211 = vpop.f32.mrb[0].mxu0
    %v2212 = vadd.f32 %v2169, %v2211
    %v2213 = vpop.f32.mrb[0].mxu0
    %v2214 = vadd.f32 %v2171, %v2213
    %v2215 = vpop.f32.mrb[0].mxu0
    %v2216 = vadd.f32 %v2173, %v2215
    %v2217 = vpop.f32.mrb[0].mxu0
    %v2218 = vadd.f32 %v2175, %v2217
    %2219 = vdwg.mxu0
    %2220 = vmatprep.subr.bf16.mxu0 %v1497
    %2221 = vmatpush1.bf16.msra.mxu0 %v1496
    %2222 = vmatprep.subr.bf16.mxu0 %v1503
    %2223 = vmatpush1.bf16.msra.mxu0 %v1502
    %2224 = vmatprep.subr.bf16.mxu0 %v1509
    %2225 = vmatpush1.bf16.msra.mxu0 %v1508
    %2226 = vmatprep.subr.bf16.mxu0 %v1515
    %2227 = vmatpush1.bf16.msra.mxu0 %v1514
    %2228 = vmatprep.subr.bf16.mxu0 %v1521
    %2229 = vmatpush1.bf16.msra.mxu0 %v1520
    %2230 = vmatprep.subr.bf16.mxu0 %v1527
    %2231 = vmatpush1.bf16.msra.mxu0 %v1526
    %2232 = vmatprep.subr.bf16.mxu0 %v1533
    %2233 = vmatpush1.bf16.msra.mxu0 %v1532
    %2234 = vmatprep.subr.bf16.mxu0 %v1539
    %2235 = vmatpush1.bf16.msra.mxu0 %v1538
    %2236 = vmatprep.subr.bf16.mxu0 %v1545
    %2237 = vmatpush1.bf16.msra.mxu0 %v1544
    %2238 = vmatprep.subr.bf16.mxu0 %v1551
    %2239 = vmatpush1.bf16.msra.mxu0 %v1550
    %2240 = vmatprep.subr.bf16.mxu0 %v1557
    %2241 = vmatpush1.bf16.msra.mxu0 %v1556
    %2242 = vmatprep.subr.bf16.mxu0 %v1563
    %2243 = vmatpush1.bf16.msra.mxu0 %v1562
    %2244 = vmatprep.subr.bf16.mxu0 %v1569
    %2245 = vmatpush1.bf16.msra.mxu0 %v1568
    %2246 = vmatprep.subr.bf16.mxu0 %v1575
    %2247 = vmatpush1.bf16.msra.mxu0 %v1574
    %2248 = vmatprep.subr.bf16.mxu0 %v1581
    %2249 = vmatpush1.bf16.msra.mxu0 %v1580
    %2250 = vmatprep.subr.bf16.mxu0 %v1587
    %2251 = vmatpush1.bf16.msra.mxu0 %v1586
    %2252 = vmatprep.mubr.bf16.mxu0 %v429
    %2253 = vmatmul.mubr.bf16.gmra.mrb[0].mxu0 %v428
    %v2254 = vpop.f32.mrb[0].mxu0
    %v2255 = vadd.f32 %v2212, %v2254
    %v2256 = vpop.f32.mrb[0].mxu0
    %v2257 = vadd.f32 %v2214, %v2256
    %v2258 = vpop.f32.mrb[0].mxu0
    %v2259 = vadd.f32 %v2216, %v2258
    %v2260 = vpop.f32.mrb[0].mxu0
    %v2261 = vadd.f32 %v2218, %v2260
    %2262 = vdwg.mxu0
    %v2263 = vtanh.pop %v1997
    %v2264 = vtanh.pop %v1999
    %v2265 = vtanh.pop %v2126
    %v2266 = vtanh.pop %v2128
    %v2267 = vtanh.pop %v2255
    %v2268 = vtanh.pop %v2257
    %v2269 = vtanh.pop %v2001
    %v2270 = vtanh.pop %v2003
    %v2271 = vtanh.pop %v2130
    %v2272 = vtanh.pop %v2132
    %v2273 = vtanh.pop %v2259
    %v2274 = vtanh.pop %v2261
    %v2275 = vlaneseq
    %v2276 = vshrl.u32 %v2275, 7
    %v2277 = vsub.s32 1, %v2276
    %v2278 = vrot.slane %v60, %v2277
    %v2279 = vlaneseq
    %v2280 = vshrl.u32 %v2279, 7
    %v2281 = vsub.s32 3, %v2280
    %v2282 = vrot.slane %v60, %v2281
    %v2283 = vlaneseq
    %v2284 = vshrl.u32 %v2283, 7
    %v2285 = vsub.s32 5, %v2284
    %v2286 = vrot.slane %v60, %v2285
    %v2287 = vlaneseq
    %v2288 = vshrl.u32 %v2287, 7
    %v2289 = vsub.s32 7, %v2288
    %v2290 = vrot.slane %v60, %v2289
    %v2291 = vlaneseq
    %v2292 = vshrl.u32 %v2291, 7
    %v2293 = vsub.s32 1, %v2292
    %v2294 = vrot.slane %v61, %v2293
    %v2295 = vlaneseq
    %v2296 = vshrl.u32 %v2295, 7
    %v2297 = vsub.s32 3, %v2296
    %v2298 = vrot.slane %v61, %v2297
    %v2305 = vlaneseq
    %v2306 = vshrl.u32 %v2305, 7
    %v2307 = vsub.s32 1, %v2306
    %v2308 = vrot.slane %v2278, %v2307
    %v2309 = vlaneseq
    %v2310 = vshrl.u32 %v2309, 7
    %v2311 = vsub.s32 1, %v2310
    %v2312 = vrot.slane %v2282, %v2311
    %v2313 = vlaneseq
    %v2314 = vshrl.u32 %v2313, 7
    %v2315 = vsub.s32 1, %v2314
    %v2316 = vrot.slane %v2286, %v2315
    %v2317 = vlaneseq
    %v2318 = vshrl.u32 %v2317, 7
    %v2319 = vsub.s32 1, %v2318
    %v2320 = vrot.slane %v2290, %v2319
    %v2321 = vlaneseq
    %v2322 = vshrl.u32 %v2321, 7
    %v2323 = vsub.s32 1, %v2322
    %v2324 = vrot.slane %v2294, %v2323
    %v2325 = vlaneseq
    %v2326 = vshrl.u32 %v2325, 7
    %v2327 = vsub.s32 1, %v2326
    %v2328 = vrot.slane %v2298, %v2327
    %v2329 = vmul.f32 %v2263, %v2308
    %v2330 = vmul.f32 %v2264, %v2312
    %v2331 = vmul.f32 %v2265, %v2316
    %v2332 = vmul.f32 %v2266, %v2320
    %v2333 = vmul.f32 %v2267, %v2324
    %v2334 = vmul.f32 %v2268, %v2328
    %v2335 = vmul.f32 %v2269, %v2308
    %v2336 = vmul.f32 %v2270, %v2312
    %v2337 = vmul.f32 %v2271, %v2316
    %v2338 = vmul.f32 %v2272, %v2320
    %v2339 = vmul.f32 %v2273, %v2324
    %v2340 = vmul.f32 %v2274, %v2328
    %v2341 = vadd.f32 %v2329, %v2330
    %v2342 = vadd.f32 %v2341, %v2331
    %v2343 = vadd.f32 %v2342, %v2332
    %v2344 = vadd.f32 %v2343, %v2333
    %v2345 = vadd.f32 %v2344, %v2334
    %2346 = vadd.xlane.f32.xlu0 %v2345
    %v2347 = vpop.xlane.xlu0 %2346
    %v2348 = vadd.f32 %v2335, %v2336
    %v2349 = vadd.f32 %v2348, %v2337
    %v2350 = vadd.f32 %v2349, %v2338
    %v2351 = vadd.f32 %v2350, %v2339
    %v2352 = vadd.f32 %v2351, %v2340
    %2353 = vadd.xlane.f32.xlu0 %v2352
    %v2354 = vpop.xlane.xlu0 %2353
    %v2355 = vrot.slane %v2347, 4
    %v2356 = vmax.f32 %v2347, %v2355
    %v2357 = vrot.slane %v2356, 2
    %v2358 = vmax.f32 %v2356, %v2357
    %v2359 = vrot.slane %v2358, 1
    %v2360 = vmax.f32 %v2358, %v2359
    %v2361 = vrot.slane %v2354, 4
    %v2362 = vmax.f32 %v2354, %v2361
    %v2363 = vrot.slane %v2362, 2
    %v2364 = vmax.f32 %v2362, %v2363
    %v2365 = vrot.slane %v2364, 1
    %v2366 = vmax.f32 %v2364, %v2365
    %v2367 = vsub.f32 %v2347, %v2360
    %v2368 = vsub.f32 %v2354, %v2366
    %v2369 = vmul.f32 %v2367, 1.442695
    %v2370 = vpow.pop %v2369
    %v2371 = vmul.f32 %v2368, 1.442695
    %v2372 = vpow.pop %v2371
    %v2373 = vrot.slane %v2370, 4
    %v2374 = vadd.f32 %v2370, %v2373
    %v2375 = vrot.slane %v2374, 2
    %v2376 = vadd.f32 %v2374, %v2375
    %v2377 = vrot.slane %v2376, 1
    %v2378 = vadd.f32 %v2376, %v2377
    %v2379 = vrot.slane %v2372, 4
    %v2380 = vadd.f32 %v2372, %v2379
    %v2381 = vrot.slane %v2380, 2
    %v2382 = vadd.f32 %v2380, %v2381
    %v2383 = vrot.slane %v2382, 1
    %v2384 = vadd.f32 %v2382, %v2383
    %v2385 = vrcp.pop %v2378
    %v2386 = vmul.f32 %v2370, %v2385
    %v2387 = vrcp.pop %v2384
    %v2388 = vmul.f32 %v2372, %v2387
    %v2389 = vunpack.c.l.bf16 %v54
    %v2390 = vunpack.c.h.bf16 %v54
    %v2391 = vunpack.c.l.bf16 %v55
    %v2392 = vunpack.c.h.bf16 %v55
    %v2393 = vunpack.c.l.bf16 %v56
    %v2394 = vunpack.c.h.bf16 %v56
    %v2395 = vunpack.c.l.bf16 %v57
    %v2396 = vunpack.c.h.bf16 %v57
    %v2397 = vunpack.c.l.bf16 %v58
    %v2398 = vunpack.c.h.bf16 %v58
    %v2399 = vunpack.c.l.bf16 %v59
    %v2400 = vunpack.c.h.bf16 %v59
    %v2401 = vmul.f32 %v2389, %v2386
    %v2402 = vmul.f32 %v2390, %v2386
    %v2403 = vmul.f32 %v2391, %v2386
    %v2404 = vmul.f32 %v2392, %v2386
    %v2405 = vmul.f32 %v2393, %v2386
    %v2406 = vmul.f32 %v2394, %v2386
    %v2407 = vmul.f32 %v2395, %v2388
    %v2408 = vmul.f32 %v2396, %v2388
    %v2409 = vmul.f32 %v2397, %v2388
    %v2410 = vmul.f32 %v2398, %v2388
    %v2411 = vmul.f32 %v2399, %v2388
    %v2412 = vmul.f32 %v2400, %v2388
    %v2413 = vrot.slane %v2401, 4
    %v2414 = vadd.f32 %v2401, %v2413
    %v2415 = vrot.slane %v2414, 2
    %v2416 = vadd.f32 %v2414, %v2415
    %v2417 = vrot.slane %v2416, 1
    %v2418 = vadd.f32 %v2416, %v2417
    %v2419 = vrot.slane %v2402, 4
    %v2420 = vadd.f32 %v2402, %v2419
    %v2421 = vrot.slane %v2420, 2
    %v2422 = vadd.f32 %v2420, %v2421
    %v2423 = vrot.slane %v2422, 1
    %v2424 = vadd.f32 %v2422, %v2423
    %v2425 = vrot.slane %v2403, 4
    %v2426 = vadd.f32 %v2403, %v2425
    %v2427 = vrot.slane %v2426, 2
    %v2428 = vadd.f32 %v2426, %v2427
    %v2429 = vrot.slane %v2428, 1
    %v2430 = vadd.f32 %v2428, %v2429
    %v2431 = vrot.slane %v2404, 4
    %v2432 = vadd.f32 %v2404, %v2431
    %v2433 = vrot.slane %v2432, 2
    %v2434 = vadd.f32 %v2432, %v2433
    %v2435 = vrot.slane %v2434, 1
    %v2436 = vadd.f32 %v2434, %v2435
    %v2437 = vrot.slane %v2405, 4
    %v2438 = vadd.f32 %v2405, %v2437
    %v2439 = vrot.slane %v2438, 2
    %v2440 = vadd.f32 %v2438, %v2439
    %v2441 = vrot.slane %v2440, 1
    %v2442 = vadd.f32 %v2440, %v2441
    %v2443 = vrot.slane %v2406, 4
    %v2444 = vadd.f32 %v2406, %v2443
    %v2445 = vrot.slane %v2444, 2
    %v2446 = vadd.f32 %v2444, %v2445
    %v2447 = vrot.slane %v2446, 1
    %v2448 = vadd.f32 %v2446, %v2447
    %v2449 = vrot.slane %v2407, 4
    %v2450 = vadd.f32 %v2407, %v2449
    %v2451 = vrot.slane %v2450, 2
    %v2452 = vadd.f32 %v2450, %v2451
    %v2453 = vrot.slane %v2452, 1
    %v2454 = vadd.f32 %v2452, %v2453
    %v2455 = vrot.slane %v2408, 4
    %v2456 = vadd.f32 %v2408, %v2455
    %v2457 = vrot.slane %v2456, 2
    %v2458 = vadd.f32 %v2456, %v2457
    %v2459 = vrot.slane %v2458, 1
    %v2460 = vadd.f32 %v2458, %v2459
    %v2461 = vrot.slane %v2409, 4
    %v2462 = vadd.f32 %v2409, %v2461
    %v2463 = vrot.slane %v2462, 2
    %v2464 = vadd.f32 %v2462, %v2463
    %v2465 = vrot.slane %v2464, 1
    %v2466 = vadd.f32 %v2464, %v2465
    %v2467 = vrot.slane %v2410, 4
    %v2468 = vadd.f32 %v2410, %v2467
    %v2469 = vrot.slane %v2468, 2
    %v2470 = vadd.f32 %v2468, %v2469
    %v2471 = vrot.slane %v2470, 1
    %v2472 = vadd.f32 %v2470, %v2471
    %v2473 = vrot.slane %v2411, 4
    %v2474 = vadd.f32 %v2411, %v2473
    %v2475 = vrot.slane %v2474, 2
    %v2476 = vadd.f32 %v2474, %v2475
    %v2477 = vrot.slane %v2476, 1
    %v2478 = vadd.f32 %v2476, %v2477
    %v2479 = vrot.slane %v2412, 4
    %v2480 = vadd.f32 %v2412, %v2479
    %v2481 = vrot.slane %v2480, 2
    %v2482 = vadd.f32 %v2480, %v2481
    %v2483 = vrot.slane %v2482, 1
    %v2484 = vadd.f32 %v2482, %v2483
    %v2497 = vcombine.low %v2418, %v2424
    %v2498 = vcombine.low %v2430, %v2436
    %v2500 = vunpack.c.l.s4 1983009808
    %v2501 = vunpack.c.0.s8 %v2500
    %v2502 = vlaneseq
    %v2503 = vshrl.u32 %v2502, 7
    %v2504 = vsub.s32 %v2501, %v2503
    %v2505 = vrot.slane %v2497, %v2504
    %v2507 = vunpack.c.l.s4 1983009808
    %v2508 = vunpack.c.0.s8 %v2507
    %v2509 = vlaneseq
    %v2510 = vshrl.u32 %v2509, 7
    %v2511 = vsub.s32 %v2508, %v2510
    %v2512 = vrot.slane %v2498, %v2511
    %v2513 = vcombine.low %v2505, %v2512
    %v2514 = vcombine.low %v2442, %v2448
    %v2516 = vunpack.c.l.s4 1983009808
    %v2517 = vunpack.c.0.s8 %v2516
    %v2518 = vlaneseq
    %v2519 = vshrl.u32 %v2518, 7
    %v2520 = vsub.s32 %v2517, %v2519
    %v2521 = vrot.slane %v2514, %v2520
    %v2522 = vcombine.low %v2454, %v2460
    %v2523 = vcombine.low %v2466, %v2472
    %v2525 = vunpack.c.l.s4 1983009808
    %v2526 = vunpack.c.0.s8 %v2525
    %v2527 = vlaneseq
    %v2528 = vshrl.u32 %v2527, 7
    %v2529 = vsub.s32 %v2526, %v2528
    %v2530 = vrot.slane %v2522, %v2529
    %v2532 = vunpack.c.l.s4 1983009808
    %v2533 = vunpack.c.0.s8 %v2532
    %v2534 = vlaneseq
    %v2535 = vshrl.u32 %v2534, 7
    %v2536 = vsub.s32 %v2533, %v2535
    %v2537 = vrot.slane %v2523, %v2536
    %v2538 = vcombine.low %v2530, %v2537
    %v2539 = vcombine.low %v2478, %v2484
    %v2541 = vunpack.c.l.s4 1983009808
    %v2542 = vunpack.c.0.s8 %v2541
    %v2543 = vlaneseq
    %v2544 = vshrl.u32 %v2543, 7
    %v2545 = vsub.s32 %v2542, %v2544
    %v2546 = vrot.slane %v2539, %v2545
    %vm2547 = vcmask 1044484
    %v2548 = vsel %vm2547, %v2513, %v2513
    %vm2549 = vcmask 1046534
    %v2550 = vsel %vm2549, %v2513, %v2548
    %v2551 = vrot.slane %v2538, 7
    %vm2552 = vcmask 1041409
    %v2553 = vsel %vm2552, %v2551, %v2550
    %vm2554 = vcmask 1043459
    %v2555 = vsel %vm2554, %v2551, %v2553
    %vm2556 = vcmask 1045509
    %v2557 = vsel %vm2556, %v2551, %v2555
    %vm2558 = vcmask 1047559
    %v2559 = vsel %vm2558, %v2551, %v2557
    %v2560 = vsel %vm2547, %v2521, %v2521
    %v2561 = vsel %vm2549, %v2521, %v2560
    %v2562 = vrot.slane %v2546, 7
    %v2563 = vsel %vm2552, %v2562, %v2561
    %v2564 = vsel %vm2554, %v2562, %v2563
    %v2565 = vsel %vm2556, %v2562, %v2564
    %v2566 = vsel %vm2558, %v2562, %v2565
    %2569 = vst [vmem:[#allocation8] sm:$0xff] %v2559
    %2570 = vst [vmem:[#allocation8 + $0x8] sm:$0xf] %v2566
    // Predicated region
    $region26: #{tpu_custom_call.1} parent=1 // pred_check
      _
    $region27: #{tpu_custom_call.1} parent=1 // pred_check_branch
      %2572 = sbr.rel (0) target = $region29
    $region28: #{tpu_custom_call.1} parent=1 // pred_region
      %s2574 = ssub.s32 192, 192
      %2575 = vsyncadd [#allocation4], %s2574
      %s2577 = sshll.u32 [#allocation8], 4
      %s2578 = int_to_ptr.vmem [resolvable:$true] %s2577
      %2580 = dma.vmem_to_hbm [thread:$0]  %s2578, 192, %s3, [#allocation4]
    $region29: #{tpu_custom_call.1} parent=1 // pred_fallthru
      _
    // Predicated region
    $region30: #{tpu_custom_call.1} parent=1 // pred_check
      _
    $region31: #{tpu_custom_call.1} parent=1 // pred_check_branch
      %2582 = sbr.rel (0) target = $region33
    $region32: #{tpu_custom_call.1} parent=1 // pred_region
      %2583 = dma.done [#allocation4], 192
    $region33: #{tpu_custom_call.1} parent=1 // pred_fallthru
      _
    %2584 = vsyncpa [#allocation3], 1
    %2585 = vsyncpa [#allocation6], 1
    %2586 = vsyncpa [#allocation4], 1

</llo_original>
